<compile_context>
chip_gen: v7x
topology: tpu7x:2x2x1
jax: 0.10.0
libtpu: 0.0.40
codegen_flags: <defaults>
</compile_context>

<pallas_src>
import numpy as np
import jax
import jax.numpy as jnp
from jax.experimental import pallas as pl
from jax.experimental.pallas import tpu as pltpu

N_QUBITS = 4
N_LAYERS = 2
DIM = 2 ** N_QUBITS          # 16
LANE = 128                   # TPU lane width
MAX_TILE_B = 8192            # max batch tile on the lane axis


# ---------------------------------------------------------------------------
# Host-side (glue): build the fixed (input-independent) circuit unitary from
# the weights.  Wire 0 is the most-significant bit of the basis-state index
# (PennyLane default.qubit convention).
# ---------------------------------------------------------------------------
def _ry(theta):
    c, s = np.cos(theta / 2.0), np.sin(theta / 2.0)
    return np.array([[c, -s], [s, c]], dtype=np.complex128)


def _rz(theta):
    return np.array(
        [[np.exp(-1j * theta / 2.0), 0.0], [0.0, np.exp(1j * theta / 2.0)]],
        dtype=np.complex128,
    )


def _single_qubit_full(gate, wire, n=N_QUBITS):
    mats = [np.eye(2, dtype=np.complex128)] * n
    mats[wire] = gate
    full = mats[0]
    for m in mats[1:]:
        full = np.kron(full, m)
    return full


def _cnot_full(ctrl, tgt, n=N_QUBITS):
    dim = 2 ** n
    M = np.zeros((dim, dim), dtype=np.complex128)
    for s in range(dim):
        if (s >> (n - 1 - ctrl)) & 1:
            ns = s ^ (1 << (n - 1 - tgt))
        else:
            ns = s
        M[ns, s] = 1.0
    return M


def build_fixed_unitary(weights_np):
    """weights_np: (n_layers, n_qubits, 2) float64 -> (16, 16) complex128."""
    U = np.eye(DIM, dtype=np.complex128)
    for l in range(N_LAYERS):
        for i in range(N_QUBITS):
            U = _single_qubit_full(_rz(weights_np[l, i, 0]), i) @ U
            U = _single_qubit_full(_ry(weights_np[l, i, 1]), i) @ U
        for i in range(N_QUBITS - 1):
            U = _cnot_full(i, i + 1) @ U
        U = _cnot_full(N_QUBITS - 1, 0) @ U
    return U


def build_pauli_z_signs():
    """(16, n_qubits) matrix of +/-1 eigenvalues of Z on each wire."""
    zs = np.empty((DIM, N_QUBITS), dtype=np.float32)
    for s in range(DIM):
        for q in range(N_QUBITS):
            bit = (s >> (N_QUBITS - 1 - q)) & 1
            zs[s, q] = 1.0 - 2.0 * bit
    return zs


def build_kernel_constants(weights_np):
    """Returns (U_fixed(16,16)c128, u_cat(32,16)f32, zsT(4,16)f32, zs(16,4)f32)."""
    U = build_fixed_unitary(weights_np)
    u_cat = np.concatenate([np.real(U), np.imag(U)], axis=0).astype(np.float32)
    zs = build_pauli_z_signs()
    zsT = np.ascontiguousarray(zs.T).astype(np.float32)
    return U, u_cat, zsT, zs


def build_blockdiag_constants(u_cat_np, zsT_np, pack):
    """Block-diagonal MXU constants for a K-packing factor `pack`.

    u_blk: (32*pack, 16*pack)  rows [0:16*pack)   = blockdiag(Re U) x pack
                               rows [16*pack: )   = blockdiag(Im U) x pack
    z_blk: (4*pack, 16*pack)   blockdiag(zs.T) x pack
    """
    ure, uim = u_cat_np[:DIM], u_cat_np[DIM:]
    u_blk = np.zeros((2 * DIM * pack, DIM * pack), dtype=np.float32)
    z_blk = np.zeros((N_QUBITS * pack, DIM * pack), dtype=np.float32)
    for p in range(pack):
        r, c = DIM * p, DIM * p
        u_blk[r:r + DIM, c:c + DIM] = ure
        u_blk[DIM * pack + r:DIM * pack + r + DIM, c:c + DIM] = uim
        z_blk[N_QUBITS * p:N_QUBITS * (p + 1), c:c + DIM] = zsT_np
    return jnp.asarray(u_blk), jnp.asarray(z_blk)


# ---------------------------------------------------------------------------
# Tiling / packing plan.
# ---------------------------------------------------------------------------
def _round_up(x, m):
    return ((x + m - 1) // m) * m


def _pick_pack_factor():
    """MXU K-packing factor: 8 fills a 128-row MXU (v5-class and older),
    16 fills the 256-row MXU on v6e / v7x (unknown kinds default to 16)."""
    try:
        kind = jax.devices()[0].device_kind.lower()
    except Exception:
        return 16
    for tag in ("v2", "v3", "v4", "v5"):
        if tag in kind:
            return 8
    return 16


def _plan_tiles(batch, pack_target):
    """Returns (pack, tile_b, b_pad, n_tiles).

    tile_b is a multiple of pack*LANE (each packed column block keeps a full
    128-lane width), capped at MAX_TILE_B.  The grid is kept >= 2 whenever
    there are >= 2 tile-units of work so both TensorCores are used on v7x.
    """
    b_min = _round_up(max(batch, 1), LANE)
    pack = max(1, min(pack_target, b_min // LANE))
    pack = 1 << (pack.bit_length() - 1)          # floor to a power of two
    unit = pack * LANE
    n_units = max(1, -(-batch // unit))
    per_tile = max(1, min(MAX_TILE_B // unit, n_units))
    if n_units >= 2:
        per_tile = min(per_tile, -(-n_units // 2))
    tile_b = per_tile * unit
    n_tiles = -(-n_units // per_tile)
    return pack, tile_b, tile_b * n_tiles, n_tiles


# ---------------------------------------------------------------------------
# Pallas kernel.
#   x8_ref   : (8, TB)            rows 0:4 = angles, rows 4:8 = same angles
#                                  (duplicated so ONE cos call covers cos+sin)
#   ublk_ref : (32*pack, 16*pack) [blockdiag(Re U); blockdiag(Im U)]
#   zblk_ref : (4*pack, 16*pack)  blockdiag(Z eigenvalue table)
#   out_ref  : (4*pack, TBc)      packed <Z_q>, full-sublane lane-dense store
# ---------------------------------------------------------------------------
def _make_kernel(pack, tile_b):
    tbc = tile_b // pack

    def kernel(x8_ref, ublk_ref, zblk_ref, out_ref):
        # One transcendental over a full 8-sublane operand:
        #   rows 0:4 -> cos(x/2), rows 4:8 -> cos(x/2 - pi/2) = sin(x/2).
        row = jax.lax.broadcasted_iota(jnp.int32, (2 * N_QUBITS, 1), 0)
        shift = jnp.where(row >= N_QUBITS,
                          jnp.float32(-np.pi / 2.0), jnp.float32(0.0))
        cs = jnp.cos(x8_ref[...] * 0.5 + shift)                  # (8, TB)

        # psi0[t, b] = prod_q (cos if bit_q(t) == 0 else sin); bit masks from iota.
        t_idx = jax.lax.broadcasted_iota(jnp.int32, (DIM, 1), 0)  # (16, 1)
        psi0 = None
        for q in range(N_QUBITS):
            bit_is_one = ((t_idx >> (N_QUBITS - 1 - q)) & 1) == 1
            term = jnp.where(bit_is_one,
                             cs[N_QUBITS + q:N_QUBITS + q + 1, :],   # sin row
                             cs[q:q + 1, :])                         # cos row
            psi0 = term if psi0 is None else psi0 * term             # (16, TB)

        # Pack `pack` lane blocks of TBc columns into the contraction dim so
        # the MXU sees K = 16*pack instead of K = 16.  128-aligned lane slices
        # + 16-row sublane concat -> pure vreg shuffling.
        if pack > 1:
            psi0 = jnp.concatenate(
                [psi0[:, p * tbc:(p + 1) * tbc] for p in range(pack)], axis=0)
        # psi0: (16*pack, TBc)

        psi_cat = jnp.dot(ublk_ref[...], psi0,
                          preferred_element_type=jnp.float32,
                          precision=jax.lax.Precision.HIGHEST)       # (32*pack, TBc)
        half_rows = DIM * pack
        psi_r = psi_cat[:half_rows, :]
        psi_i = psi_cat[half_rows:, :]
        probs = psi_r * psi_r + psi_i * psi_i                        # (16*pack, TBc)

        out_ref[...] = jnp.dot(zblk_ref[...], probs,
                               preferred_element_type=jnp.float32,
                               precision=jax.lax.Precision.HIGHEST)  # (4*pack, TBc)

    return kernel


def quantum_layer(x, u_cat_np, zsT_np):
    """x: (B, n_qubits) float -> (B, n_qubits) float32 of <Z_q>."""
    B = int(x.shape[0])
    pack, tile_b, b_pad, n_tiles = _plan_tiles(B, _pick_pack_factor())
    tbc = tile_b // pack
    u_blk, z_blk = build_blockdiag_constants(u_cat_np, zsT_np, pack)

    xp = x.astype(jnp.float32)
    if b_pad != B:
        # Zero padding is harmless: cos(0)=1, sin(0)=0 -> |0000>; sliced off below.
        xp = jnp.pad(xp, ((0, b_pad - B), (0, 0)))
    # Duplicate the 4 angle columns so the kernel gets a full 8-sublane block
    # and can evaluate cos AND sin with a single transcendental call.
    # TODO(synk): callers that can already produce the (8, B) layout and
    # consume the packed (4*pack, B/pack) output should do so and skip these
    # wrapper relayout ops entirely.
    x8 = jnp.concatenate([xp, xp], axis=1).T                          # (8, b_pad)

    flops = int(n_tiles * tbc * 2 * (2 * DIM + N_QUBITS) * pack * DIM * pack
                + b_pad * DIM * 11)
    transcendentals = int(8 * b_pad)
    bytes_accessed = int(b_pad * (8 + N_QUBITS) * 4
                         + (2 * DIM + N_QUBITS) * pack * DIM * pack * 4)

    out_packed = pl.pallas_call(
        _make_kernel(pack, tile_b),
        out_shape=jax.ShapeDtypeStruct((N_QUBITS * pack, b_pad // pack),
                                       jnp.float32),
        grid=(n_tiles,),
        in_specs=[
            pl.BlockSpec((2 * N_QUBITS, tile_b), lambda i: (0, i)),        # x (dup rows)
            pl.BlockSpec((2 * DIM * pack, DIM * pack), lambda i: (0, 0)),  # [Re;Im] blkdiag
            pl.BlockSpec((N_QUBITS * pack, DIM * pack), lambda i: (0, 0)), # Z blkdiag
        ],
        out_specs=pl.BlockSpec((N_QUBITS * pack, tbc), lambda i: (0, i)),
        compiler_params=pltpu.CompilerParams(
            dimension_semantics=("parallel",)),
        cost_estimate=pl.CostEstimate(
            flops=flops,
            transcendentals=transcendentals,
            bytes_accessed=bytes_accessed),
    )(x8, u_blk, z_blk)

    # Un-pack: out_packed[4p+q, i*tbc+j] = <Z_q> of sample i*tile_b + p*tbc + j.
    out = (out_packed.reshape(pack, N_QUBITS, n_tiles, tbc)
           .transpose(2, 0, 3, 1)
           .reshape(b_pad, N_QUBITS))
    return out[:B]


# ---------------------------------------------------------------------------
# Vectorized numpy reference (same math, float64) for a sanity check.
# ---------------------------------------------------------------------------
def reference(x_np, U_fixed, zs):
    half = x_np / 2.0                                            # (B, 4)
    t = np.arange(DIM)[:, None]                                  # (16, 1)
    q = np.arange(N_QUBITS)[None, :]                             # (1, 4)
    bits = (t >> (N_QUBITS - 1 - q)) & 1                         # (16, 4)
    c = np.cos(half)[:, None, :]                                 # (B, 1, 4)
    s = np.sin(half)[:, None, :]
    psi0 = np.where(bits[None, :, :] == 1, s, c).prod(axis=2)    # (B, 16)
    psi = psi0 @ U_fixed.T                                       # (B, 16) complex
    probs = np.abs(psi) ** 2
    return (probs @ zs.astype(np.float64)).astype(np.float32)


if __name__ == "__main__":
    key = jax.random.PRNGKey(0)
    k_w, k_x1, k_x2 = jax.random.split(key, 3)

    # Deterministic weight init (TorchLayer default ~ U[0, 2*pi)).
    weights = jax.random.uniform(
        k_w, (N_LAYERS, N_QUBITS, 2), minval=0.0, maxval=2.0 * np.pi,
        dtype=jnp.float32)
    weights_np = np.asarray(weights, dtype=np.float64)

    # Fixed circuit unitary (input-independent part) + kernel constants.
    U_fixed, u_cat_np, zsT_np, zs_np = build_kernel_constants(weights_np)

    # Small batch (module-consistent shape).
    x = jax.random.uniform(
        k_x1, (8, N_QUBITS), minval=-np.pi, maxval=np.pi, dtype=jnp.float32)
    out = jax.block_until_ready(quantum_layer(x, u_cat_np, zsT_np))
    ref = reference(np.asarray(x, dtype=np.float64), U_fixed, zs_np)
    np.testing.assert_allclose(np.asarray(out), ref, atol=1e-4, rtol=1e-4)

    # Larger batch exercises the packed-MXU path, padding and the multi-tile grid.
    x_big = jax.random.uniform(
        k_x2, (4100, N_QUBITS), minval=-np.pi, maxval=np.pi, dtype=jnp.float32)
    out_big = jax.block_until_ready(quantum_layer(x_big, u_cat_np, zsT_np))
    ref_big = reference(np.asarray(x_big, dtype=np.float64), U_fixed, zs_np)
    np.testing.assert_allclose(np.asarray(out_big), ref_big, atol=1e-4, rtol=1e-4)

    print("KERNEL_OK")
</pallas_src>

<mosaic_0001>
module attributes {stable_mosaic.version = 11 : i64} {
  func.func @kernel(%arg0: i32, %arg1: memref<8x128xf32, #tpu.memory_space<vmem>>, %arg2: memref<32x16xf32, #tpu.memory_space<vmem>>, %arg3: memref<4x16xf32, #tpu.memory_space<vmem>>, %arg4: memref<4x128xf32, #tpu.memory_space<vmem>>) attributes {dimension_semantics = [#tpu.dimension_semantics<parallel>], iteration_bounds = array<i64: 1>, scalar_prefetch = 0 : i64, scratch_operands = 0 : i64, tpu.core_type = #tpu.core_type<tc>, window_params = [{transform_indices = @transform_0, window_bounds = array<i64: 8, 128>}, {pipeline_mode = #tpu.pipeline_mode<synchronous>, transform_indices = @transform_1, window_bounds = array<i64: 32, 16>}, {pipeline_mode = #tpu.pipeline_mode<synchronous>, transform_indices = @transform_2, window_bounds = array<i64: 4, 16>}, {transform_indices = @transform_3, window_bounds = array<i64: 4, 128>}]} {
    %0 = tpu.iota {dimensions = array<i32: 0>} : vector<8x1xi32>
    %c4_i32 = arith.constant 4 : i32
    %1 = vector.broadcast %c4_i32 : i32 to vector<8x1xi32>
    %2 = arith.cmpi sge, %0, %1 : vector<8x1xi32>
    %cst = arith.constant -1.57079637 : f32
    %cst_0 = arith.constant 0.000000e+00 : f32
    %3 = vector.broadcast %cst : f32 to vector<8x1xf32>
    %4 = vector.broadcast %cst_0 : f32 to vector<8x1xf32>
    %5 = arith.select %2, %3, %4 : vector<8x1xi1>, vector<8x1xf32>
    %c0 = arith.constant 0 : index
    %c0_1 = arith.constant 0 : index
    %6 = vector.load %arg1[%c0, %c0_1] : memref<8x128xf32, #tpu.memory_space<vmem>>, vector<8x128xf32>
    %cst_2 = arith.constant 5.000000e-01 : f32
    %7 = vector.broadcast %cst_2 : f32 to vector<8x128xf32>
    %8 = arith.mulf %6, %7 : vector<8x128xf32>
    %9 = vector.broadcast %5 : vector<8x1xf32> to vector<8x128xf32>
    %10 = arith.addf %8, %9 : vector<8x128xf32>
    %11 = math.cos %10 : vector<8x128xf32>
    %12 = tpu.iota {dimensions = array<i32: 0>} : vector<16x1xi32>
    %c3_i32 = arith.constant 3 : i32
    %13 = vector.broadcast %c3_i32 : i32 to vector<16x1xi32>
    %14 = arith.shrsi %12, %13 : vector<16x1xi32>
    %c1_i32 = arith.constant 1 : i32
    %15 = vector.broadcast %c1_i32 : i32 to vector<16x1xi32>
    %16 = arith.andi %14, %15 : vector<16x1xi32>
    %c1_i32_3 = arith.constant 1 : i32
    %17 = vector.broadcast %c1_i32_3 : i32 to vector<16x1xi32>
    %18 = arith.cmpi eq, %16, %17 : vector<16x1xi32>
    %19 = vector.extract_strided_slice %11 {offsets = [4, 0], sizes = [1, 128], strides = [1, 1]} : vector<8x128xf32> to vector<1x128xf32>
    %20 = vector.extract_strided_slice %11 {offsets = [0, 0], sizes = [1, 128], strides = [1, 1]} : vector<8x128xf32> to vector<1x128xf32>
    %21 = vector.shape_cast %18 : vector<16x1xi1> to vector<16x1xi1>
    %22 = vector.broadcast %21 : vector<16x1xi1> to vector<16x128xi1>
    %23 = vector.shape_cast %19 : vector<1x128xf32> to vector<1x128xf32>
    %24 = vector.broadcast %23 : vector<1x128xf32> to vector<16x128xf32>
    %25 = vector.shape_cast %20 : vector<1x128xf32> to vector<1x128xf32>
    %26 = vector.broadcast %25 : vector<1x128xf32> to vector<16x128xf32>
    %27 = arith.select %22, %24, %26 : vector<16x128xi1>, vector<16x128xf32>
    %c2_i32 = arith.constant 2 : i32
    %28 = vector.broadcast %c2_i32 : i32 to vector<16x1xi32>
    %29 = arith.shrsi %12, %28 : vector<16x1xi32>
    %c1_i32_4 = arith.constant 1 : i32
    %30 = vector.broadcast %c1_i32_4 : i32 to vector<16x1xi32>
    %31 = arith.andi %29, %30 : vector<16x1xi32>
    %c1_i32_5 = arith.constant 1 : i32
    %32 = vector.broadcast %c1_i32_5 : i32 to vector<16x1xi32>
    %33 = arith.cmpi eq, %31, %32 : vector<16x1xi32>
    %34 = vector.extract_strided_slice %11 {offsets = [5, 0], sizes = [1, 128], strides = [1, 1]} : vector<8x128xf32> to vector<1x128xf32>
    %35 = vector.extract_strided_slice %11 {offsets = [1, 0], sizes = [1, 128], strides = [1, 1]} : vector<8x128xf32> to vector<1x128xf32>
    %36 = vector.shape_cast %33 : vector<16x1xi1> to vector<16x1xi1>
    %37 = vector.broadcast %36 : vector<16x1xi1> to vector<16x128xi1>
    %38 = vector.shape_cast %34 : vector<1x128xf32> to vector<1x128xf32>
    %39 = vector.broadcast %38 : vector<1x128xf32> to vector<16x128xf32>
    %40 = vector.shape_cast %35 : vector<1x128xf32> to vector<1x128xf32>
    %41 = vector.broadcast %40 : vector<1x128xf32> to vector<16x128xf32>
    %42 = arith.select %37, %39, %41 : vector<16x128xi1>, vector<16x128xf32>
    %43 = arith.mulf %27, %42 : vector<16x128xf32>
    %c1_i32_6 = arith.constant 1 : i32
    %44 = vector.broadcast %c1_i32_6 : i32 to vector<16x1xi32>
    %45 = arith.shrsi %12, %44 : vector<16x1xi32>
    %c1_i32_7 = arith.constant 1 : i32
    %46 = vector.broadcast %c1_i32_7 : i32 to vector<16x1xi32>
    %47 = arith.andi %45, %46 : vector<16x1xi32>
    %c1_i32_8 = arith.constant 1 : i32
    %48 = vector.broadcast %c1_i32_8 : i32 to vector<16x1xi32>
    %49 = arith.cmpi eq, %47, %48 : vector<16x1xi32>
    %50 = vector.extract_strided_slice %11 {offsets = [6, 0], sizes = [1, 128], strides = [1, 1]} : vector<8x128xf32> to vector<1x128xf32>
    %51 = vector.extract_strided_slice %11 {offsets = [2, 0], sizes = [1, 128], strides = [1, 1]} : vector<8x128xf32> to vector<1x128xf32>
    %52 = vector.shape_cast %49 : vector<16x1xi1> to vector<16x1xi1>
    %53 = vector.broadcast %52 : vector<16x1xi1> to vector<16x128xi1>
    %54 = vector.shape_cast %50 : vector<1x128xf32> to vector<1x128xf32>
    %55 = vector.broadcast %54 : vector<1x128xf32> to vector<16x128xf32>
    %56 = vector.shape_cast %51 : vector<1x128xf32> to vector<1x128xf32>
    %57 = vector.broadcast %56 : vector<1x128xf32> to vector<16x128xf32>
    %58 = arith.select %53, %55, %57 : vector<16x128xi1>, vector<16x128xf32>
    %59 = arith.mulf %43, %58 : vector<16x128xf32>
    %c0_i32 = arith.constant 0 : i32
    %60 = vector.broadcast %c0_i32 : i32 to vector<16x1xi32>
    %61 = arith.shrsi %12, %60 : vector<16x1xi32>
    %c1_i32_9 = arith.constant 1 : i32
    %62 = vector.broadcast %c1_i32_9 : i32 to vector<16x1xi32>
    %63 = arith.andi %61, %62 : vector<16x1xi32>
    %c1_i32_10 = arith.constant 1 : i32
    %64 = vector.broadcast %c1_i32_10 : i32 to vector<16x1xi32>
    %65 = arith.cmpi eq, %63, %64 : vector<16x1xi32>
    %66 = vector.extract_strided_slice %11 {offsets = [7, 0], sizes = [1, 128], strides = [1, 1]} : vector<8x128xf32> to vector<1x128xf32>
    %67 = vector.extract_strided_slice %11 {offsets = [3, 0], sizes = [1, 128], strides = [1, 1]} : vector<8x128xf32> to vector<1x128xf32>
    %68 = vector.shape_cast %65 : vector<16x1xi1> to vector<16x1xi1>
    %69 = vector.broadcast %68 : vector<16x1xi1> to vector<16x128xi1>
    %70 = vector.shape_cast %66 : vector<1x128xf32> to vector<1x128xf32>
    %71 = vector.broadcast %70 : vector<1x128xf32> to vector<16x128xf32>
    %72 = vector.shape_cast %67 : vector<1x128xf32> to vector<1x128xf32>
    %73 = vector.broadcast %72 : vector<1x128xf32> to vector<16x128xf32>
    %74 = arith.select %69, %71, %73 : vector<16x128xi1>, vector<16x128xf32>
    %75 = arith.mulf %59, %74 : vector<16x128xf32>
    %c0_11 = arith.constant 0 : index
    %c0_12 = arith.constant 0 : index
    %76 = vector.load %arg2[%c0_11, %c0_12] : memref<32x16xf32, #tpu.memory_space<vmem>>, vector<32x16xf32>
    %cst_13 = arith.constant dense<0.000000e+00> : vector<32x128xf32>
    %77 = tpu.matmul %76, %75, %cst_13 {dimension_numbers = #tpu.dot_dimension_numbers<[1], [0], [0], [1], [0, 0, 1, 1], [], []>, precision = #tpu.contract_precision<fp32>} : vector<32x16xf32>, vector<16x128xf32>, vector<32x128xf32> -> vector<32x128xf32>
    %78 = vector.extract_strided_slice %77 {offsets = [0, 0], sizes = [16, 128], strides = [1, 1]} : vector<32x128xf32> to vector<16x128xf32>
    %79 = vector.extract_strided_slice %77 {offsets = [16, 0], sizes = [16, 128], strides = [1, 1]} : vector<32x128xf32> to vector<16x128xf32>
    %80 = arith.mulf %78, %78 : vector<16x128xf32>
    %81 = arith.mulf %79, %79 : vector<16x128xf32>
    %82 = arith.addf %80, %81 : vector<16x128xf32>
    %c0_14 = arith.constant 0 : index
    %c0_15 = arith.constant 0 : index
    %83 = vector.load %arg3[%c0_14, %c0_15] : memref<4x16xf32, #tpu.memory_space<vmem>>, vector<4x16xf32>
    %cst_16 = arith.constant dense<0.000000e+00> : vector<4x128xf32>
    %84 = tpu.matmul %83, %82, %cst_16 {dimension_numbers = #tpu.dot_dimension_numbers<[1], [0], [0], [1], [0, 0, 1, 1], [], []>, precision = #tpu.contract_precision<fp32>} : vector<4x16xf32>, vector<16x128xf32>, vector<4x128xf32> -> vector<4x128xf32>
    %c0_17 = arith.constant 0 : index
    %c0_18 = arith.constant 0 : index
    %85 = vector.load %arg4[%c0_17, %c0_18] : memref<4x128xf32, #tpu.memory_space<vmem>>, vector<4x128xf32>
    tpu.vector_store %arg4[%c0_17, %c0_18], %84 {strides = array<i32>} : memref<4x128xf32, #tpu.memory_space<vmem>>, vector<4x128xf32>,
    return
  }
  func.func @transform_0(%arg0: i32) -> (i32, i32) {
    %c0_i32 = arith.constant 0 : i32
    %c0_i32_0 = arith.constant 0 : i32
    return %c0_i32, %arg0 : i32, i32
  }
  func.func @transform_1(%arg0: i32) -> (i32, i32) {
    %c0_i32 = arith.constant 0 : i32
    %c0_i32_0 = arith.constant 0 : i32
    %c0_i32_1 = arith.constant 0 : i32
    return %c0_i32, %c0_i32_0 : i32, i32
  }
  func.func @transform_2(%arg0: i32) -> (i32, i32) {
    %c0_i32 = arith.constant 0 : i32
    %c0_i32_0 = arith.constant 0 : i32
    %c0_i32_1 = arith.constant 0 : i32
    return %c0_i32, %c0_i32_0 : i32, i32
  }
  func.func @transform_3(%arg0: i32) -> (i32, i32) {
    %c0_i32 = arith.constant 0 : i32
    %c0_i32_0 = arith.constant 0 : i32
    return %c0_i32, %arg0 : i32, i32
  }
}

</mosaic_0001>

<llo_original>
// kernel: tpu_custom_call.1
$region0: #{tpu_custom_call.1}
  #allocation0 [shape = 'u32[]', space=smem, size = 0x4, offset = 0x4, fixed_abs, tag = 'smem constant byte address 0x4 - core index']
  #allocation1 [shape = 'u32[144,128]{1,0:T(1,128)}', space=vmem, size = 0x12000, scoped, tag = 'internal scratch']
  %s0 = inlined_call_operand.vmem [shape: f32[8,128], index: 0, kind: input, shape index: {}]
  %s1 = inlined_call_operand.vmem [shape: f32[32,16], index: 1, kind: input, shape index: {}]
  %s2 = inlined_call_operand.vmem [shape: f32[4,16], index: 2, kind: input, shape index: {}]
  %s3 = inlined_call_operand.hbm [shape: f32[4,128], index: 3, kind: output, shape index: {}]
  %s4 = sld [smem:[#allocation0]]
  $region22: #{tpu_custom_call.1} parent=0
    _
  %s6 = ssub.s32 1, %s4
  %s7 = scalar_select 0, %s6, %s4
  $region1: #{tpu_custom_call.1} parent=0
    #allocation2 [shape = 'u8[2048]{0}', space=vmem, size = 0x800, scoped, tag = 'output window, operand 0, single buffered']
    #allocation3 [shape = 's32[1]{0}', space=sflag, size = 0x4, scoped, tag = 'scoped memory for tpu_custom_call.1']
    %8 = vsyncpa [#allocation3], 0
    // Predicated region
    $region2: #{tpu_custom_call.1} parent=1 // pred_check
      _
    $region3: #{tpu_custom_call.1} parent=1 // pred_check_branch
      %10 = sbr.rel (0) target = $region5
    $region4: #{tpu_custom_call.1} parent=1 // pred_region
      _
    $region5: #{tpu_custom_call.1} parent=1 // pred_fallthru
      _
    // Predicated region
    $region6: #{tpu_custom_call.1} parent=1 // pred_check
      _
    $region7: #{tpu_custom_call.1} parent=1 // pred_check_branch
      %12 = sbr.rel (0) target = $region9
    $region8: #{tpu_custom_call.1} parent=1 // pred_region
      _
    $region9: #{tpu_custom_call.1} parent=1 // pred_fallthru
      _
    // Predicated region
    $region10: #{tpu_custom_call.1} parent=1 // pred_check
      _
    $region11: #{tpu_custom_call.1} parent=1 // pred_check_branch
      %14 = sbr.rel (0) target = $region13
    $region12: #{tpu_custom_call.1} parent=1 // pred_region
      _
    $region13: #{tpu_custom_call.1} parent=1 // pred_fallthru
      _
    %v15 = vlaneseq
    %v16 = vshrl.u32 %v15, 7
    %vm17 = vcmp.ge.s32.totalorder %v16, 4
    %v18 = vsel %vm17, -1.5707964, 0.0
    %v19 = vld [vmem:[%s0] sm:$0xff]
    %v20 = vmul.f32 %v19, 0.5
    %v21 = vadd.f32 %v20, %v18
    %v22 = vand.u32 2147483647, %v21
    %vm23 = vcmp.le.f32.partialorder %v22, 0.7853982
    %vm24 = vcmp.lt.s32.totalorder %v21, 0
    %v25 = vand.u32 %v21, 2139095040
    %v26 = vshrl.u32 %v25, 23
    %v27 = vsub.s32 %v26, 127
    %v28 = vand.u32 2147483647, %v21
    %v29 = vand.u32 %v28, 8388607
    %v30 = vor.u32 %v29, 8388608
    %v31 = vsub.s32 0, %v30
    %v32 = vadd.s32 %v27, 1
    %vm33 = vcmp.gt.s32.totalorder %v32, 0
    %v34 = vsel %vm33, %v32, 0
    %v35 = vshrl.u32 %v34, 5
    %v36 = vand.u32 %v34, 31
    %v37 = vsub.s32 32, %v36
    %v38 = vshrl.u32 683565275, %v37
    %v39 = vshll.u32 683565275, %v36
    %v40 = vshrl.u32 2475754826, %v37
    %v41 = vor.u32 %v39, %v40
    %v42 = vshll.u32 2475754826, %v36
    %v43 = vshrl.u32 2131351028, %v37
    %v44 = vor.u32 %v42, %v43
    %v45 = vshll.u32 2131351028, %v36
    %v46 = vshrl.u32 2102212464, %v37
    %v47 = vor.u32 %v45, %v46
    %v48 = vshll.u32 2102212464, %v36
    %v49 = vshrl.u32 920167782, %v37
    %v50 = vor.u32 %v48, %v49
    %v51 = vshll.u32 920167782, %v36
    %v52 = vshrl.u32 1326507024, %v37
    %v53 = vor.u32 %v51, %v52
    %vm54 = vcmp.lt.s32.totalorder %v35, 1
    %vm55 = vcmp.lt.s32.totalorder %v35, 2
    %vm56 = vcmp.lt.s32.totalorder %v35, 3
    %vm57 = vcmp.lt.s32.totalorder %v35, 4
    %v58 = vsel %vm54, %v38, %v41
    %v59 = vsel %vm57, %v47, 2102212464
    %v60 = vsel %vm56, %v44, %v59
    %v61 = vsel %vm55, %v58, %v60
    %v62 = vsel %vm54, %v41, %v44
    %v63 = vsel %vm57, %v50, 920167782
    %v64 = vsel %vm56, %v47, %v63
    %v65 = vsel %vm55, %v62, %v64
    %v66 = vsel %vm54, %v44, %v47
    %v67 = vsel %vm57, %v53, 1326507024
    %v68 = vsel %vm56, %v50, %v67
    %v69 = vsel %vm55, %v66, %v68
    %v70 = vshll.u32 %v30, 8
    %v71 = vmul.u32.u64.compose %v70, %v69
    %v72 = vextract.low.u32 %v71
    %v73 = vextract.high.u32 %v71
    %v74 = vmul.u32.u64.compose %v70, %v65
    %v75 = vextract.low.u32 %v74
    %v76 = vextract.high.u32 %v74
    %v77 = vmul.u32 %v70, %v61
    %v78 = vadd.s32 %v73, %v75
    %vm79 = vc.u32 %v73, %v75
    %v80 = vadd.s32 %v76, 1
    %v81 = vsel %vm79, %v80, %v76
    %v82 = vadd.s32 %v77, %v81
    %v83 = vadd.s32 %v82, 536870912
    %v84 = vshrl.u32 %v83, 30
    %v85 = vshll.u32 %v84, 30
    %v86 = vsub.s32 %v82, %v85
    %vm87 = vcmp.lt.s32.totalorder %v86, 0
    %v88 = vsub.s32 0, %v86
    %v89 = vsel %vm87, %v88, %v86
    %v90 = vclz %v89
    %v91 = vsub.s32 %v90, 2
    %vm92 = vcmp.gt.s32.totalorder 0, %v91
    %v93 = vsel %vm92, 0, %v91
    %v94 = vsub.s32 32, %v93
    %v95 = vshll.u32 %v86, %v93
    %v96 = vshrl.u32 %v78, %v94
    %v97 = vor.u32 %v95, %v96
    %v98 = vsub.s32 4294967266, %v93
    %v99 = vadd.s32 %v98, 127
    %v100 = vshll.u32 %v99, 23
    %v101 = vor.u32 4788187, %v100
    %v102 = vand.u32 2147483647, %v101
    %v104 = vcvt.s32.f32 %v97
    %v105 = vmul.f32 %v104, %v102
    %v106 = vxor.u32 %v105, 2147483648
    %v107 = vsel %vm24, %v106, %v105
    %v108 = vsub.s32 4, %v84
    %v109 = vsel %vm24, %v108, %v84
    %v110 = vsel %vm23, %v21, %v107
    %v111 = vsel %vm23, 0, %v109
    %v112 = vcosq.f32.pop %v110
    %v113 = vsinq.f32.pop %v110
    %vm114 = vweird.f32 %v21
    %v115 = vand.u32 %v111, 3
    %vm116 = vcmp.lt.s32.totalorder %v115, 2
    %vm117 = vcmp.eq.s32.totalorder %v115, 0
    %v118 = vxor.u32 %v113, 2147483648
    %v119 = vsel %vm117, %v112, %v118
    %vm120 = vcmp.eq.s32.totalorder %v115, 2
    %v121 = vxor.u32 %v112, 2147483648
    %v122 = vsel %vm120, %v121, %v113
    %v123 = vsel %vm116, %v119, %v122
    %v124 = vsel %vm114, nan, %v123
    %v125 = vadd.s32 %v16, 8
    %v126 = vshra.s32 %v16, 3
    %v127 = vshra.s32 %v125, 3
    %v128 = vand.u32 %v126, 1
    %v129 = vand.u32 %v127, 1
    %vm130 = vcmp.eq.s32.totalorder %v128, 1
    %vm131 = vcmp.eq.s32.totalorder %v129, 1
    %v132 = vsel %vm130, 1, 0
    %v133 = vsel %vm131, 1, 0
    %vm134 = vcmp.eq.s32.totalorder %v132, 1
    %vm135 = vcmp.eq.s32.totalorder %v133, 1
    %v136 = vlaneseq
    %v137 = vshrl.u32 %v136, 7
    %v138 = vsub.s32 4, %v137
    %v139 = vrot.slane %v124, %v138
    %v140 = vlaneseq
    %v141 = vshrl.u32 %v140, 7
    %v142 = vsub.s32 0, %v141
    %v143 = vrot.slane %v124, %v142
    %v144 = vsel %vm134, %v139, %v143
    %v145 = vsel %vm135, %v139, %v143
    %v146 = vshra.s32 %v16, 2
    %v147 = vshra.s32 %v125, 2
    %v148 = vand.u32 %v146, 1
    %v149 = vand.u32 %v147, 1
    %vm150 = vcmp.eq.s32.totalorder %v148, 1
    %vm151 = vcmp.eq.s32.totalorder %v149, 1
    %v152 = vsel %vm150, 1, 0
    %v153 = vsel %vm151, 1, 0
    %vm154 = vcmp.eq.s32.totalorder %v152, 1
    %vm155 = vcmp.eq.s32.totalorder %v153, 1
    %v156 = vlaneseq
    %v157 = vshrl.u32 %v156, 7
    %v158 = vsub.s32 5, %v157
    %v159 = vrot.slane %v124, %v158
    %v160 = vlaneseq
    %v161 = vshrl.u32 %v160, 7
    %v162 = vsub.s32 1, %v161
    %v163 = vrot.slane %v124, %v162
    %v164 = vsel %vm154, %v159, %v163
    %v165 = vsel %vm155, %v159, %v163
    %v166 = vmul.f32 %v144, %v164
    %v167 = vmul.f32 %v145, %v165
    %v168 = vshra.s32 %v16, 1
    %v169 = vshra.s32 %v125, 1
    %v170 = vand.u32 %v168, 1
    %v171 = vand.u32 %v169, 1
    %vm172 = vcmp.eq.s32.totalorder %v170, 1
    %vm173 = vcmp.eq.s32.totalorder %v171, 1
    %v174 = vsel %vm172, 1, 0
    %v175 = vsel %vm173, 1, 0
    %vm176 = vcmp.eq.s32.totalorder %v174, 1
    %vm177 = vcmp.eq.s32.totalorder %v175, 1
    %v178 = vlaneseq
    %v179 = vshrl.u32 %v178, 7
    %v180 = vsub.s32 6, %v179
    %v181 = vrot.slane %v124, %v180
    %v182 = vlaneseq
    %v183 = vshrl.u32 %v182, 7
    %v184 = vsub.s32 2, %v183
    %v185 = vrot.slane %v124, %v184
    %v186 = vsel %vm176, %v181, %v185
    %v187 = vsel %vm177, %v181, %v185
    %v188 = vmul.f32 %v166, %v186
    %v189 = vmul.f32 %v167, %v187
    %v190 = vand.u32 %v16, 1
    %v191 = vand.u32 %v125, 1
    %vm192 = vcmp.eq.s32.totalorder %v190, 1
    %vm193 = vcmp.eq.s32.totalorder %v191, 1
    %v194 = vsel %vm192, 1, 0
    %v195 = vsel %vm193, 1, 0
    %vm196 = vcmp.eq.s32.totalorder %v194, 1
    %vm197 = vcmp.eq.s32.totalorder %v195, 1
    %v198 = vlaneseq
    %v199 = vshrl.u32 %v198, 7
    %v200 = vsub.s32 7, %v199
    %v201 = vrot.slane %v124, %v200
    %v202 = vlaneseq
    %v203 = vshrl.u32 %v202, 7
    %v204 = vsub.s32 3, %v203
    %v205 = vrot.slane %v124, %v204
    %v206 = vsel %vm196, %v201, %v205
    %v207 = vsel %vm197, %v201, %v205
    %v208 = vmul.f32 %v188, %v206
    %v209 = vmul.f32 %v189, %v207
    %v210 = vld [vmem:[%s1] sm:$0xff]
    %v211 = vld [vmem:[%s1 + $0x8] sm:$0xff]
    %v212 = vld [vmem:[%s1 + $0x10] sm:$0xff]
    %v213 = vld [vmem:[%s1 + $0x18] sm:$0xff]
    %vm214 = vcmask 130048
    %v216 = vsel %vm214, %v210, 0
    %v219 = vsel %vm214, %v211, 0
    %v222 = vsel %vm214, %v212, 0
    %v225 = vsel %vm214, %v213, 0
    %227 = vmatprep.subr.mxu0 0.0
    %v228 = vand.u32 %v208, 4294901760
    %229 = vmatpush1.msra.mxu0 %v228
    %230 = vmatprep.subr.mxu0 0.0
    %v231 = vand.u32 %v209, 4294901760
    %232 = vmatpush1.msra.mxu0 %v231
    %233 = vmatprep.subr.mxu0 0.0
    %234 = vmatpush1.msra.mxu0 0.0
    %235 = vmatprep.subr.mxu0 0.0
    %236 = vmatpush1.msra.mxu0 0.0
    %237 = vmatprep.subr.mxu0 0.0
    %238 = vmatpush1.msra.mxu0 0.0
    %239 = vmatprep.subr.mxu0 0.0
    %240 = vmatpush1.msra.mxu0 0.0
    %241 = vmatprep.subr.mxu0 0.0
    %242 = vmatpush1.msra.mxu0 0.0
    %243 = vmatprep.subr.mxu0 0.0
    %244 = vmatpush1.msra.mxu0 0.0
    %245 = vmatprep.subr.mxu0 0.0
    %246 = vmatpush1.msra.mxu0 0.0
    %247 = vmatprep.subr.mxu0 0.0
    %248 = vmatpush1.msra.mxu0 0.0
    %249 = vmatprep.subr.mxu0 0.0
    %250 = vmatpush1.msra.mxu0 0.0
    %251 = vmatprep.subr.mxu0 0.0
    %252 = vmatpush1.msra.mxu0 0.0
    %253 = vmatprep.subr.mxu0 0.0
    %254 = vmatpush1.msra.mxu0 0.0
    %255 = vmatprep.subr.mxu0 0.0
    %256 = vmatpush1.msra.mxu0 0.0
    %257 = vmatprep.subr.mxu0 0.0
    %258 = vmatpush1.msra.mxu0 0.0
    %259 = vmatprep.subr.mxu0 0.0
    %260 = vmatpush1.msra.mxu0 0.0
    %261 = vmatprep.subr.mxu0 0.0
    %262 = vmatpush1.msra.mxu0 0.0
    %263 = vmatprep.subr.mxu0 0.0
    %264 = vmatpush1.msra.mxu0 0.0
    %265 = vmatprep.subr.mxu0 0.0
    %266 = vmatpush1.msra.mxu0 0.0
    %267 = vmatprep.subr.mxu0 0.0
    %268 = vmatpush1.msra.mxu0 0.0
    %269 = vmatprep.subr.mxu0 0.0
    %270 = vmatpush1.msra.mxu0 0.0
    %271 = vmatprep.subr.mxu0 0.0
    %272 = vmatpush1.msra.mxu0 0.0
    %273 = vmatprep.subr.mxu0 0.0
    %274 = vmatpush1.msra.mxu0 0.0
    %275 = vmatprep.subr.mxu0 0.0
    %276 = vmatpush1.msra.mxu0 0.0
    %277 = vmatprep.subr.mxu0 0.0
    %278 = vmatpush1.msra.mxu0 0.0
    %279 = vmatprep.subr.mxu0 0.0
    %280 = vmatpush1.msra.mxu0 0.0
    %281 = vmatprep.subr.mxu0 0.0
    %282 = vmatpush1.msra.mxu0 0.0
    %283 = vmatprep.subr.mxu0 0.0
    %284 = vmatpush1.msra.mxu0 0.0
    %285 = vmatprep.subr.mxu0 0.0
    %286 = vmatpush1.msra.mxu0 0.0
    %287 = vmatprep.subr.mxu0 0.0
    %288 = vmatpush1.msra.mxu0 0.0
    %289 = vmatprep.subr.mxu0 0.0
    %290 = vmatpush1.msra.mxu0 0.0
    %291 = vmatprep.subr.mxu0 0.0
    %292 = vmatpush1.msra.mxu0 0.0
    %293 = vmatprep.mubr.f32.mxu0 0.0
    %v294 = vand.u32 %v216, 4294901760
    %v295 = vsub.f32 %v216, %v294
    %v296 = vand.u32 %v295, 4294901760
    %v297 = vsub.f32 %v295, %v296
    %v298 = vand.u32 %v297, 4294901760
    %299 = vmatmul.mubr.f32.gmra.mrb[0].mxu0 %v298
    %v300 = vpop.f32.mrb[0].mxu0
    %v301 = vadd.f32 0.0, %v300
    %v302 = vpop.f32.mrb[0].mxu0
    %303 = vmatprep.mubr.f32.mxu0 0.0
    %v304 = vand.u32 %v219, 4294901760
    %v305 = vsub.f32 %v219, %v304
    %v306 = vand.u32 %v305, 4294901760
    %v307 = vsub.f32 %v305, %v306
    %v308 = vand.u32 %v307, 4294901760
    %309 = vmatmul.mubr.f32.gmra.mrb[0].mxu0 %v308
    %v310 = vpop.f32.mrb[0].mxu0
    %v311 = vadd.f32 0.0, %v310
    %v312 = vpop.f32.mrb[0].mxu0
    %313 = vmatprep.mubr.f32.mxu0 0.0
    %v314 = vand.u32 %v222, 4294901760
    %v315 = vsub.f32 %v222, %v314
    %v316 = vand.u32 %v315, 4294901760
    %v317 = vsub.f32 %v315, %v316
    %v318 = vand.u32 %v317, 4294901760
    %319 = vmatmul.mubr.f32.gmra.mrb[0].mxu0 %v318
    %v320 = vpop.f32.mrb[0].mxu0
    %v321 = vadd.f32 0.0, %v320
    %v322 = vpop.f32.mrb[0].mxu0
    %323 = vmatprep.mubr.f32.mxu0 0.0
    %v324 = vand.u32 %v225, 4294901760
    %v325 = vsub.f32 %v225, %v324
    %v326 = vand.u32 %v325, 4294901760
    %v327 = vsub.f32 %v325, %v326
    %v328 = vand.u32 %v327, 4294901760
    %329 = vmatmul.mubr.f32.gmra.mrb[0].mxu0 %v328
    %v330 = vpop.f32.mrb[0].mxu0
    %v331 = vadd.f32 0.0, %v330
    %v332 = vpop.f32.mrb[0].mxu0
    %333 = vdwg.mxu0
    %334 = vmatprep.subr.mxu0 0.0
    %v335 = vand.u32 %v208, 4294901760
    %v336 = vsub.f32 %v208, %v335
    %v337 = vand.u32 %v336, 4294901760
    %v338 = vsub.f32 %v336, %v337
    %v339 = vand.u32 %v338, 4294901760
    %340 = vmatpush1.msra.mxu0 %v339
    %341 = vmatprep.subr.mxu0 0.0
    %v342 = vand.u32 %v209, 4294901760
    %v343 = vsub.f32 %v209, %v342
    %v344 = vand.u32 %v343, 4294901760
    %v345 = vsub.f32 %v343, %v344
    %v346 = vand.u32 %v345, 4294901760
    %347 = vmatpush1.msra.mxu0 %v346
    %348 = vmatprep.subr.mxu0 0.0
    %349 = vmatpush1.msra.mxu0 0.0
    %350 = vmatprep.subr.mxu0 0.0
    %351 = vmatpush1.msra.mxu0 0.0
    %352 = vmatprep.subr.mxu0 0.0
    %353 = vmatpush1.msra.mxu0 0.0
    %354 = vmatprep.subr.mxu0 0.0
    %355 = vmatpush1.msra.mxu0 0.0
    %356 = vmatprep.subr.mxu0 0.0
    %357 = vmatpush1.msra.mxu0 0.0
    %358 = vmatprep.subr.mxu0 0.0
    %359 = vmatpush1.msra.mxu0 0.0
    %360 = vmatprep.subr.mxu0 0.0
    %361 = vmatpush1.msra.mxu0 0.0
    %362 = vmatprep.subr.mxu0 0.0
    %363 = vmatpush1.msra.mxu0 0.0
    %364 = vmatprep.subr.mxu0 0.0
    %365 = vmatpush1.msra.mxu0 0.0
    %366 = vmatprep.subr.mxu0 0.0
    %367 = vmatpush1.msra.mxu0 0.0
    %368 = vmatprep.subr.mxu0 0.0
    %369 = vmatpush1.msra.mxu0 0.0
    %370 = vmatprep.subr.mxu0 0.0
    %371 = vmatpush1.msra.mxu0 0.0
    %372 = vmatprep.subr.mxu0 0.0
    %373 = vmatpush1.msra.mxu0 0.0
    %374 = vmatprep.subr.mxu0 0.0
    %375 = vmatpush1.msra.mxu0 0.0
    %376 = vmatprep.subr.mxu0 0.0
    %377 = vmatpush1.msra.mxu0 0.0
    %378 = vmatprep.subr.mxu0 0.0
    %379 = vmatpush1.msra.mxu0 0.0
    %380 = vmatprep.subr.mxu0 0.0
    %381 = vmatpush1.msra.mxu0 0.0
    %382 = vmatprep.subr.mxu0 0.0
    %383 = vmatpush1.msra.mxu0 0.0
    %384 = vmatprep.subr.mxu0 0.0
    %385 = vmatpush1.msra.mxu0 0.0
    %386 = vmatprep.subr.mxu0 0.0
    %387 = vmatpush1.msra.mxu0 0.0
    %388 = vmatprep.subr.mxu0 0.0
    %389 = vmatpush1.msra.mxu0 0.0
    %390 = vmatprep.subr.mxu0 0.0
    %391 = vmatpush1.msra.mxu0 0.0
    %392 = vmatprep.subr.mxu0 0.0
    %393 = vmatpush1.msra.mxu0 0.0
    %394 = vmatprep.subr.mxu0 0.0
    %395 = vmatpush1.msra.mxu0 0.0
    %396 = vmatprep.subr.mxu0 0.0
    %397 = vmatpush1.msra.mxu0 0.0
    %398 = vmatprep.subr.mxu0 0.0
    %399 = vmatpush1.msra.mxu0 0.0
    %400 = vmatprep.subr.mxu0 0.0
    %401 = vmatpush1.msra.mxu0 0.0
    %402 = vmatprep.subr.mxu0 0.0
    %403 = vmatpush1.msra.mxu0 0.0
    %404 = vmatprep.subr.mxu0 0.0
    %405 = vmatpush1.msra.mxu0 0.0
    %406 = vmatprep.subr.mxu0 0.0
    %407 = vmatpush1.msra.mxu0 0.0
    %408 = vmatprep.mubr.f32.mxu0 0.0
    %v409 = vand.u32 %v216, 4294901760
    %410 = vmatmul.mubr.f32.gmra.mrb[0].mxu0 %v409
    %v411 = vpop.f32.mrb[0].mxu0
    %v412 = vadd.f32 %v301, %v411
    %v413 = vpop.f32.mrb[0].mxu0
    %414 = vmatprep.mubr.f32.mxu0 0.0
    %v415 = vand.u32 %v219, 4294901760
    %416 = vmatmul.mubr.f32.gmra.mrb[0].mxu0 %v415
    %v417 = vpop.f32.mrb[0].mxu0
    %v418 = vadd.f32 %v311, %v417
    %v419 = vpop.f32.mrb[0].mxu0
    %420 = vmatprep.mubr.f32.mxu0 0.0
    %v421 = vand.u32 %v222, 4294901760
    %422 = vmatmul.mubr.f32.gmra.mrb[0].mxu0 %v421
    %v423 = vpop.f32.mrb[0].mxu0
    %v424 = vadd.f32 %v321, %v423
    %v425 = vpop.f32.mrb[0].mxu0
    %426 = vmatprep.mubr.f32.mxu0 0.0
    %v427 = vand.u32 %v225, 4294901760
    %428 = vmatmul.mubr.f32.gmra.mrb[0].mxu0 %v427
    %v429 = vpop.f32.mrb[0].mxu0
    %v430 = vadd.f32 %v331, %v429
    %v431 = vpop.f32.mrb[0].mxu0
    %432 = vdwg.mxu0
    %433 = vmatprep.subr.mxu0 0.0
    %v434 = vand.u32 %v208, 4294901760
    %v435 = vsub.f32 %v208, %v434
    %436 = vmatpush1.msra.mxu0 %v435
    %437 = vmatprep.subr.mxu0 0.0
    %v438 = vand.u32 %v209, 4294901760
    %v439 = vsub.f32 %v209, %v438
    %440 = vmatpush1.msra.mxu0 %v439
    %441 = vmatprep.subr.mxu0 0.0
    %442 = vmatpush1.msra.mxu0 0.0
    %443 = vmatprep.subr.mxu0 0.0
    %444 = vmatpush1.msra.mxu0 0.0
    %445 = vmatprep.subr.mxu0 0.0
    %446 = vmatpush1.msra.mxu0 0.0
    %447 = vmatprep.subr.mxu0 0.0
    %448 = vmatpush1.msra.mxu0 0.0
    %449 = vmatprep.subr.mxu0 0.0
    %450 = vmatpush1.msra.mxu0 0.0
    %451 = vmatprep.subr.mxu0 0.0
    %452 = vmatpush1.msra.mxu0 0.0
    %453 = vmatprep.subr.mxu0 0.0
    %454 = vmatpush1.msra.mxu0 0.0
    %455 = vmatprep.subr.mxu0 0.0
    %456 = vmatpush1.msra.mxu0 0.0
    %457 = vmatprep.subr.mxu0 0.0
    %458 = vmatpush1.msra.mxu0 0.0
    %459 = vmatprep.subr.mxu0 0.0
    %460 = vmatpush1.msra.mxu0 0.0
    %461 = vmatprep.subr.mxu0 0.0
    %462 = vmatpush1.msra.mxu0 0.0
    %463 = vmatprep.subr.mxu0 0.0
    %464 = vmatpush1.msra.mxu0 0.0
    %465 = vmatprep.subr.mxu0 0.0
    %466 = vmatpush1.msra.mxu0 0.0
    %467 = vmatprep.subr.mxu0 0.0
    %468 = vmatpush1.msra.mxu0 0.0
    %469 = vmatprep.subr.mxu0 0.0
    %470 = vmatpush1.msra.mxu0 0.0
    %471 = vmatprep.subr.mxu0 0.0
    %472 = vmatpush1.msra.mxu0 0.0
    %473 = vmatprep.subr.mxu0 0.0
    %474 = vmatpush1.msra.mxu0 0.0
    %475 = vmatprep.subr.mxu0 0.0
    %476 = vmatpush1.msra.mxu0 0.0
    %477 = vmatprep.subr.mxu0 0.0
    %478 = vmatpush1.msra.mxu0 0.0
    %479 = vmatprep.subr.mxu0 0.0
    %480 = vmatpush1.msra.mxu0 0.0
    %481 = vmatprep.subr.mxu0 0.0
    %482 = vmatpush1.msra.mxu0 0.0
    %483 = vmatprep.subr.mxu0 0.0
    %484 = vmatpush1.msra.mxu0 0.0
    %485 = vmatprep.subr.mxu0 0.0
    %486 = vmatpush1.msra.mxu0 0.0
    %487 = vmatprep.subr.mxu0 0.0
    %488 = vmatpush1.msra.mxu0 0.0
    %489 = vmatprep.subr.mxu0 0.0
    %490 = vmatpush1.msra.mxu0 0.0
    %491 = vmatprep.subr.mxu0 0.0
    %492 = vmatpush1.msra.mxu0 0.0
    %493 = vmatprep.subr.mxu0 0.0
    %494 = vmatpush1.msra.mxu0 0.0
    %495 = vmatprep.subr.mxu0 0.0
    %496 = vmatpush1.msra.mxu0 0.0
    %497 = vmatprep.subr.mxu0 0.0
    %498 = vmatpush1.msra.mxu0 0.0
    %499 = vmatprep.subr.mxu0 0.0
    %500 = vmatpush1.msra.mxu0 0.0
    %501 = vmatprep.mubr.f32.mxu0 0.0
    %v502 = vand.u32 %v216, 4294901760
    %v503 = vsub.f32 %v216, %v502
    %504 = vmatmul.mubr.f32.gmra.mrb[0].mxu0 %v503
    %v505 = vpop.f32.mrb[0].mxu0
    %v506 = vadd.f32 %v412, %v505
    %v507 = vpop.f32.mrb[0].mxu0
    %508 = vmatprep.mubr.f32.mxu0 0.0
    %v509 = vand.u32 %v219, 4294901760
    %v510 = vsub.f32 %v219, %v509
    %511 = vmatmul.mubr.f32.gmra.mrb[0].mxu0 %v510
    %v512 = vpop.f32.mrb[0].mxu0
    %v513 = vadd.f32 %v418, %v512
    %v514 = vpop.f32.mrb[0].mxu0
    %515 = vmatprep.mubr.f32.mxu0 0.0
    %v516 = vand.u32 %v222, 4294901760
    %v517 = vsub.f32 %v222, %v516
    %518 = vmatmul.mubr.f32.gmra.mrb[0].mxu0 %v517
    %v519 = vpop.f32.mrb[0].mxu0
    %v520 = vadd.f32 %v424, %v519
    %v521 = vpop.f32.mrb[0].mxu0
    %522 = vmatprep.mubr.f32.mxu0 0.0
    %v523 = vand.u32 %v225, 4294901760
    %v524 = vsub.f32 %v225, %v523
    %525 = vmatmul.mubr.f32.gmra.mrb[0].mxu0 %v524
    %v526 = vpop.f32.mrb[0].mxu0
    %v527 = vadd.f32 %v430, %v526
    %v528 = vpop.f32.mrb[0].mxu0
    %529 = vdwg.mxu0
    %530 = vmatprep.subr.mxu0 0.0
    %v531 = vand.u32 %v208, 4294901760
    %532 = vmatpush1.msra.mxu0 %v531
    %533 = vmatprep.subr.mxu0 0.0
    %v534 = vand.u32 %v209, 4294901760
    %535 = vmatpush1.msra.mxu0 %v534
    %536 = vmatprep.subr.mxu0 0.0
    %537 = vmatpush1.msra.mxu0 0.0
    %538 = vmatprep.subr.mxu0 0.0
    %539 = vmatpush1.msra.mxu0 0.0
    %540 = vmatprep.subr.mxu0 0.0
    %541 = vmatpush1.msra.mxu0 0.0
    %542 = vmatprep.subr.mxu0 0.0
    %543 = vmatpush1.msra.mxu0 0.0
    %544 = vmatprep.subr.mxu0 0.0
    %545 = vmatpush1.msra.mxu0 0.0
    %546 = vmatprep.subr.mxu0 0.0
    %547 = vmatpush1.msra.mxu0 0.0
    %548 = vmatprep.subr.mxu0 0.0
    %549 = vmatpush1.msra.mxu0 0.0
    %550 = vmatprep.subr.mxu0 0.0
    %551 = vmatpush1.msra.mxu0 0.0
    %552 = vmatprep.subr.mxu0 0.0
    %553 = vmatpush1.msra.mxu0 0.0
    %554 = vmatprep.subr.mxu0 0.0
    %555 = vmatpush1.msra.mxu0 0.0
    %556 = vmatprep.subr.mxu0 0.0
    %557 = vmatpush1.msra.mxu0 0.0
    %558 = vmatprep.subr.mxu0 0.0
    %559 = vmatpush1.msra.mxu0 0.0
    %560 = vmatprep.subr.mxu0 0.0
    %561 = vmatpush1.msra.mxu0 0.0
    %562 = vmatprep.subr.mxu0 0.0
    %563 = vmatpush1.msra.mxu0 0.0
    %564 = vmatprep.subr.mxu0 0.0
    %565 = vmatpush1.msra.mxu0 0.0
    %566 = vmatprep.subr.mxu0 0.0
    %567 = vmatpush1.msra.mxu0 0.0
    %568 = vmatprep.subr.mxu0 0.0
    %569 = vmatpush1.msra.mxu0 0.0
    %570 = vmatprep.subr.mxu0 0.0
    %571 = vmatpush1.msra.mxu0 0.0
    %572 = vmatprep.subr.mxu0 0.0
    %573 = vmatpush1.msra.mxu0 0.0
    %574 = vmatprep.subr.mxu0 0.0
    %575 = vmatpush1.msra.mxu0 0.0
    %576 = vmatprep.subr.mxu0 0.0
    %577 = vmatpush1.msra.mxu0 0.0
    %578 = vmatprep.subr.mxu0 0.0
    %579 = vmatpush1.msra.mxu0 0.0
    %580 = vmatprep.subr.mxu0 0.0
    %581 = vmatpush1.msra.mxu0 0.0
    %582 = vmatprep.subr.mxu0 0.0
    %583 = vmatpush1.msra.mxu0 0.0
    %584 = vmatprep.subr.mxu0 0.0
    %585 = vmatpush1.msra.mxu0 0.0
    %586 = vmatprep.subr.mxu0 0.0
    %587 = vmatpush1.msra.mxu0 0.0
    %588 = vmatprep.subr.mxu0 0.0
    %589 = vmatpush1.msra.mxu0 0.0
    %590 = vmatprep.subr.mxu0 0.0
    %591 = vmatpush1.msra.mxu0 0.0
    %592 = vmatprep.subr.mxu0 0.0
    %593 = vmatpush1.msra.mxu0 0.0
    %594 = vmatprep.subr.mxu0 0.0
    %595 = vmatpush1.msra.mxu0 0.0
    %596 = vmatprep.mubr.f32.mxu0 0.0
    %v597 = vand.u32 %v216, 4294901760
    %v598 = vsub.f32 %v216, %v597
    %v599 = vand.u32 %v598, 4294901760
    %600 = vmatmul.mubr.f32.gmra.mrb[0].mxu0 %v599
    %v601 = vpop.f32.mrb[0].mxu0
    %v602 = vadd.f32 %v506, %v601
    %v603 = vpop.f32.mrb[0].mxu0
    %604 = vmatprep.mubr.f32.mxu0 0.0
    %v605 = vand.u32 %v219, 4294901760
    %v606 = vsub.f32 %v219, %v605
    %v607 = vand.u32 %v606, 4294901760
    %608 = vmatmul.mubr.f32.gmra.mrb[0].mxu0 %v607
    %v609 = vpop.f32.mrb[0].mxu0
    %v610 = vadd.f32 %v513, %v609
    %v611 = vpop.f32.mrb[0].mxu0
    %612 = vmatprep.mubr.f32.mxu0 0.0
    %v613 = vand.u32 %v222, 4294901760
    %v614 = vsub.f32 %v222, %v613
    %v615 = vand.u32 %v614, 4294901760
    %616 = vmatmul.mubr.f32.gmra.mrb[0].mxu0 %v615
    %v617 = vpop.f32.mrb[0].mxu0
    %v618 = vadd.f32 %v520, %v617
    %v619 = vpop.f32.mrb[0].mxu0
    %620 = vmatprep.mubr.f32.mxu0 0.0
    %v621 = vand.u32 %v225, 4294901760
    %v622 = vsub.f32 %v225, %v621
    %v623 = vand.u32 %v622, 4294901760
    %624 = vmatmul.mubr.f32.gmra.mrb[0].mxu0 %v623
    %v625 = vpop.f32.mrb[0].mxu0
    %v626 = vadd.f32 %v527, %v625
    %v627 = vpop.f32.mrb[0].mxu0
    %628 = vdwg.mxu0
    %629 = vmatprep.subr.mxu0 0.0
    %v630 = vand.u32 %v208, 4294901760
    %v631 = vsub.f32 %v208, %v630
    %v632 = vand.u32 %v631, 4294901760
    %633 = vmatpush1.msra.mxu0 %v632
    %634 = vmatprep.subr.mxu0 0.0
    %v635 = vand.u32 %v209, 4294901760
    %v636 = vsub.f32 %v209, %v635
    %v637 = vand.u32 %v636, 4294901760
    %638 = vmatpush1.msra.mxu0 %v637
    %639 = vmatprep.subr.mxu0 0.0
    %640 = vmatpush1.msra.mxu0 0.0
    %641 = vmatprep.subr.mxu0 0.0
    %642 = vmatpush1.msra.mxu0 0.0
    %643 = vmatprep.subr.mxu0 0.0
    %644 = vmatpush1.msra.mxu0 0.0
    %645 = vmatprep.subr.mxu0 0.0
    %646 = vmatpush1.msra.mxu0 0.0
    %647 = vmatprep.subr.mxu0 0.0
    %648 = vmatpush1.msra.mxu0 0.0
    %649 = vmatprep.subr.mxu0 0.0
    %650 = vmatpush1.msra.mxu0 0.0
    %651 = vmatprep.subr.mxu0 0.0
    %652 = vmatpush1.msra.mxu0 0.0
    %653 = vmatprep.subr.mxu0 0.0
    %654 = vmatpush1.msra.mxu0 0.0
    %655 = vmatprep.subr.mxu0 0.0
    %656 = vmatpush1.msra.mxu0 0.0
    %657 = vmatprep.subr.mxu0 0.0
    %658 = vmatpush1.msra.mxu0 0.0
    %659 = vmatprep.subr.mxu0 0.0
    %660 = vmatpush1.msra.mxu0 0.0
    %661 = vmatprep.subr.mxu0 0.0
    %662 = vmatpush1.msra.mxu0 0.0
    %663 = vmatprep.subr.mxu0 0.0
    %664 = vmatpush1.msra.mxu0 0.0
    %665 = vmatprep.subr.mxu0 0.0
    %666 = vmatpush1.msra.mxu0 0.0
    %667 = vmatprep.subr.mxu0 0.0
    %668 = vmatpush1.msra.mxu0 0.0
    %669 = vmatprep.subr.mxu0 0.0
    %670 = vmatpush1.msra.mxu0 0.0
    %671 = vmatprep.subr.mxu0 0.0
    %672 = vmatpush1.msra.mxu0 0.0
    %673 = vmatprep.subr.mxu0 0.0
    %674 = vmatpush1.msra.mxu0 0.0
    %675 = vmatprep.subr.mxu0 0.0
    %676 = vmatpush1.msra.mxu0 0.0
    %677 = vmatprep.subr.mxu0 0.0
    %678 = vmatpush1.msra.mxu0 0.0
    %679 = vmatprep.subr.mxu0 0.0
    %680 = vmatpush1.msra.mxu0 0.0
    %681 = vmatprep.subr.mxu0 0.0
    %682 = vmatpush1.msra.mxu0 0.0
    %683 = vmatprep.subr.mxu0 0.0
    %684 = vmatpush1.msra.mxu0 0.0
    %685 = vmatprep.subr.mxu0 0.0
    %686 = vmatpush1.msra.mxu0 0.0
    %687 = vmatprep.subr.mxu0 0.0
    %688 = vmatpush1.msra.mxu0 0.0
    %689 = vmatprep.subr.mxu0 0.0
    %690 = vmatpush1.msra.mxu0 0.0
    %691 = vmatprep.subr.mxu0 0.0
    %692 = vmatpush1.msra.mxu0 0.0
    %693 = vmatprep.subr.mxu0 0.0
    %694 = vmatpush1.msra.mxu0 0.0
    %695 = vmatprep.subr.mxu0 0.0
    %696 = vmatpush1.msra.mxu0 0.0
    %697 = vmatprep.subr.mxu0 0.0
    %698 = vmatpush1.msra.mxu0 0.0
    %699 = vmatprep.mubr.f32.mxu0 0.0
    %v700 = vand.u32 %v216, 4294901760
    %701 = vmatmul.mubr.f32.gmra.mrb[0].mxu0 %v700
    %v702 = vpop.f32.mrb[0].mxu0
    %v703 = vadd.f32 %v602, %v702
    %v704 = vpop.f32.mrb[0].mxu0
    %705 = vmatprep.mubr.f32.mxu0 0.0
    %v706 = vand.u32 %v219, 4294901760
    %707 = vmatmul.mubr.f32.gmra.mrb[0].mxu0 %v706
    %v708 = vpop.f32.mrb[0].mxu0
    %v709 = vadd.f32 %v610, %v708
    %v710 = vpop.f32.mrb[0].mxu0
    %711 = vmatprep.mubr.f32.mxu0 0.0
    %v712 = vand.u32 %v222, 4294901760
    %713 = vmatmul.mubr.f32.gmra.mrb[0].mxu0 %v712
    %v714 = vpop.f32.mrb[0].mxu0
    %v715 = vadd.f32 %v618, %v714
    %v716 = vpop.f32.mrb[0].mxu0
    %717 = vmatprep.mubr.f32.mxu0 0.0
    %v718 = vand.u32 %v225, 4294901760
    %719 = vmatmul.mubr.f32.gmra.mrb[0].mxu0 %v718
    %v720 = vpop.f32.mrb[0].mxu0
    %v721 = vadd.f32 %v626, %v720
    %v722 = vpop.f32.mrb[0].mxu0
    %723 = vdwg.mxu0
    %724 = vmatprep.subr.mxu0 0.0
    %v725 = vand.u32 %v208, 4294901760
    %726 = vmatpush1.msra.mxu0 %v725
    %727 = vmatprep.subr.mxu0 0.0
    %v728 = vand.u32 %v209, 4294901760
    %729 = vmatpush1.msra.mxu0 %v728
    %730 = vmatprep.subr.mxu0 0.0
    %731 = vmatpush1.msra.mxu0 0.0
    %732 = vmatprep.subr.mxu0 0.0
    %733 = vmatpush1.msra.mxu0 0.0
    %734 = vmatprep.subr.mxu0 0.0
    %735 = vmatpush1.msra.mxu0 0.0
    %736 = vmatprep.subr.mxu0 0.0
    %737 = vmatpush1.msra.mxu0 0.0
    %738 = vmatprep.subr.mxu0 0.0
    %739 = vmatpush1.msra.mxu0 0.0
    %740 = vmatprep.subr.mxu0 0.0
    %741 = vmatpush1.msra.mxu0 0.0
    %742 = vmatprep.subr.mxu0 0.0
    %743 = vmatpush1.msra.mxu0 0.0
    %744 = vmatprep.subr.mxu0 0.0
    %745 = vmatpush1.msra.mxu0 0.0
    %746 = vmatprep.subr.mxu0 0.0
    %747 = vmatpush1.msra.mxu0 0.0
    %748 = vmatprep.subr.mxu0 0.0
    %749 = vmatpush1.msra.mxu0 0.0
    %750 = vmatprep.subr.mxu0 0.0
    %751 = vmatpush1.msra.mxu0 0.0
    %752 = vmatprep.subr.mxu0 0.0
    %753 = vmatpush1.msra.mxu0 0.0
    %754 = vmatprep.subr.mxu0 0.0
    %755 = vmatpush1.msra.mxu0 0.0
    %756 = vmatprep.subr.mxu0 0.0
    %757 = vmatpush1.msra.mxu0 0.0
    %758 = vmatprep.subr.mxu0 0.0
    %759 = vmatpush1.msra.mxu0 0.0
    %760 = vmatprep.subr.mxu0 0.0
    %761 = vmatpush1.msra.mxu0 0.0
    %762 = vmatprep.subr.mxu0 0.0
    %763 = vmatpush1.msra.mxu0 0.0
    %764 = vmatprep.subr.mxu0 0.0
    %765 = vmatpush1.msra.mxu0 0.0
    %766 = vmatprep.subr.mxu0 0.0
    %767 = vmatpush1.msra.mxu0 0.0
    %768 = vmatprep.subr.mxu0 0.0
    %769 = vmatpush1.msra.mxu0 0.0
    %770 = vmatprep.subr.mxu0 0.0
    %771 = vmatpush1.msra.mxu0 0.0
    %772 = vmatprep.subr.mxu0 0.0
    %773 = vmatpush1.msra.mxu0 0.0
    %774 = vmatprep.subr.mxu0 0.0
    %775 = vmatpush1.msra.mxu0 0.0
    %776 = vmatprep.subr.mxu0 0.0
    %777 = vmatpush1.msra.mxu0 0.0
    %778 = vmatprep.subr.mxu0 0.0
    %779 = vmatpush1.msra.mxu0 0.0
    %780 = vmatprep.subr.mxu0 0.0
    %781 = vmatpush1.msra.mxu0 0.0
    %782 = vmatprep.subr.mxu0 0.0
    %783 = vmatpush1.msra.mxu0 0.0
    %784 = vmatprep.subr.mxu0 0.0
    %785 = vmatpush1.msra.mxu0 0.0
    %786 = vmatprep.subr.mxu0 0.0
    %787 = vmatpush1.msra.mxu0 0.0
    %788 = vmatprep.subr.mxu0 0.0
    %789 = vmatpush1.msra.mxu0 0.0
    %790 = vmatprep.mubr.f32.mxu0 0.0
    %v791 = vand.u32 %v216, 4294901760
    %792 = vmatmul.mubr.f32.gmra.mrb[0].mxu0 %v791
    %v793 = vpop.f32.mrb[0].mxu0
    %v794 = vadd.f32 %v703, %v793
    %v795 = vpop.f32.mrb[0].mxu0
    %796 = vmatprep.mubr.f32.mxu0 0.0
    %v797 = vand.u32 %v219, 4294901760
    %798 = vmatmul.mubr.f32.gmra.mrb[0].mxu0 %v797
    %v799 = vpop.f32.mrb[0].mxu0
    %v800 = vadd.f32 %v709, %v799
    %v801 = vpop.f32.mrb[0].mxu0
    %802 = vmatprep.mubr.f32.mxu0 0.0
    %v803 = vand.u32 %v222, 4294901760
    %804 = vmatmul.mubr.f32.gmra.mrb[0].mxu0 %v803
    %v805 = vpop.f32.mrb[0].mxu0
    %v806 = vadd.f32 %v715, %v805
    %v807 = vpop.f32.mrb[0].mxu0
    %808 = vmatprep.mubr.f32.mxu0 0.0
    %v809 = vand.u32 %v225, 4294901760
    %810 = vmatmul.mubr.f32.gmra.mrb[0].mxu0 %v809
    %v811 = vpop.f32.mrb[0].mxu0
    %v812 = vadd.f32 %v721, %v811
    %v813 = vpop.f32.mrb[0].mxu0
    %814 = vdwg.mxu0
    %v815 = vmul.f32 %v794, %v794
    %v816 = vmul.f32 %v800, %v800
    %v817 = vmul.f32 %v806, %v806
    %v818 = vmul.f32 %v812, %v812
    %v819 = vadd.f32 %v815, %v817
    %v820 = vadd.f32 %v816, %v818
    %v821 = vld [vmem:[%s2] sm:$0xf]
    %v823 = vsel %vm214, %v821, 0
    %825 = vmatprep.subr.mxu0 0.0
    %v826 = vand.u32 %v819, 4294901760
    %827 = vmatpush1.msra.mxu0 %v826
    %828 = vmatprep.subr.mxu0 0.0
    %v829 = vand.u32 %v820, 4294901760
    %830 = vmatpush1.msra.mxu0 %v829
    %831 = vmatprep.subr.mxu0 0.0
    %832 = vmatpush1.msra.mxu0 0.0
    %833 = vmatprep.subr.mxu0 0.0
    %834 = vmatpush1.msra.mxu0 0.0
    %835 = vmatprep.subr.mxu0 0.0
    %836 = vmatpush1.msra.mxu0 0.0
    %837 = vmatprep.subr.mxu0 0.0
    %838 = vmatpush1.msra.mxu0 0.0
    %839 = vmatprep.subr.mxu0 0.0
    %840 = vmatpush1.msra.mxu0 0.0
    %841 = vmatprep.subr.mxu0 0.0
    %842 = vmatpush1.msra.mxu0 0.0
    %843 = vmatprep.subr.mxu0 0.0
    %844 = vmatpush1.msra.mxu0 0.0
    %845 = vmatprep.subr.mxu0 0.0
    %846 = vmatpush1.msra.mxu0 0.0
    %847 = vmatprep.subr.mxu0 0.0
    %848 = vmatpush1.msra.mxu0 0.0
    %849 = vmatprep.subr.mxu0 0.0
    %850 = vmatpush1.msra.mxu0 0.0
    %851 = vmatprep.subr.mxu0 0.0
    %852 = vmatpush1.msra.mxu0 0.0
    %853 = vmatprep.subr.mxu0 0.0
    %854 = vmatpush1.msra.mxu0 0.0
    %855 = vmatprep.subr.mxu0 0.0
    %856 = vmatpush1.msra.mxu0 0.0
    %857 = vmatprep.subr.mxu0 0.0
    %858 = vmatpush1.msra.mxu0 0.0
    %859 = vmatprep.subr.mxu0 0.0
    %860 = vmatpush1.msra.mxu0 0.0
    %861 = vmatprep.subr.mxu0 0.0
    %862 = vmatpush1.msra.mxu0 0.0
    %863 = vmatprep.subr.mxu0 0.0
    %864 = vmatpush1.msra.mxu0 0.0
    %865 = vmatprep.subr.mxu0 0.0
    %866 = vmatpush1.msra.mxu0 0.0
    %867 = vmatprep.subr.mxu0 0.0
    %868 = vmatpush1.msra.mxu0 0.0
    %869 = vmatprep.subr.mxu0 0.0
    %870 = vmatpush1.msra.mxu0 0.0
    %871 = vmatprep.subr.mxu0 0.0
    %872 = vmatpush1.msra.mxu0 0.0
    %873 = vmatprep.subr.mxu0 0.0
    %874 = vmatpush1.msra.mxu0 0.0
    %875 = vmatprep.subr.mxu0 0.0
    %876 = vmatpush1.msra.mxu0 0.0
    %877 = vmatprep.subr.mxu0 0.0
    %878 = vmatpush1.msra.mxu0 0.0
    %879 = vmatprep.subr.mxu0 0.0
    %880 = vmatpush1.msra.mxu0 0.0
    %881 = vmatprep.subr.mxu0 0.0
    %882 = vmatpush1.msra.mxu0 0.0
    %883 = vmatprep.subr.mxu0 0.0
    %884 = vmatpush1.msra.mxu0 0.0
    %885 = vmatprep.subr.mxu0 0.0
    %886 = vmatpush1.msra.mxu0 0.0
    %887 = vmatprep.subr.mxu0 0.0
    %888 = vmatpush1.msra.mxu0 0.0
    %889 = vmatprep.subr.mxu0 0.0
    %890 = vmatpush1.msra.mxu0 0.0
    %891 = vmatprep.mubr.f32.mxu0 0.0
    %v892 = vand.u32 %v823, 4294901760
    %v893 = vsub.f32 %v823, %v892
    %v894 = vand.u32 %v893, 4294901760
    %v895 = vsub.f32 %v893, %v894
    %v896 = vand.u32 %v895, 4294901760
    %897 = vmatmul.mubr.f32.gmra.mrb[0].mxu0 %v896
    %v898 = vpop.f32.mrb[0].mxu0
    %v899 = vadd.f32 0.0, %v898
    %v900 = vpop.f32.mrb[0].mxu0
    %901 = vdwg.mxu0
    %902 = vmatprep.subr.mxu0 0.0
    %v903 = vand.u32 %v819, 4294901760
    %v904 = vsub.f32 %v819, %v903
    %v905 = vand.u32 %v904, 4294901760
    %v906 = vsub.f32 %v904, %v905
    %v907 = vand.u32 %v906, 4294901760
    %908 = vmatpush1.msra.mxu0 %v907
    %909 = vmatprep.subr.mxu0 0.0
    %v910 = vand.u32 %v820, 4294901760
    %v911 = vsub.f32 %v820, %v910
    %v912 = vand.u32 %v911, 4294901760
    %v913 = vsub.f32 %v911, %v912
    %v914 = vand.u32 %v913, 4294901760
    %915 = vmatpush1.msra.mxu0 %v914
    %916 = vmatprep.subr.mxu0 0.0
    %917 = vmatpush1.msra.mxu0 0.0
    %918 = vmatprep.subr.mxu0 0.0
    %919 = vmatpush1.msra.mxu0 0.0
    %920 = vmatprep.subr.mxu0 0.0
    %921 = vmatpush1.msra.mxu0 0.0
    %922 = vmatprep.subr.mxu0 0.0
    %923 = vmatpush1.msra.mxu0 0.0
    %924 = vmatprep.subr.mxu0 0.0
    %925 = vmatpush1.msra.mxu0 0.0
    %926 = vmatprep.subr.mxu0 0.0
    %927 = vmatpush1.msra.mxu0 0.0
    %928 = vmatprep.subr.mxu0 0.0
    %929 = vmatpush1.msra.mxu0 0.0
    %930 = vmatprep.subr.mxu0 0.0
    %931 = vmatpush1.msra.mxu0 0.0
    %932 = vmatprep.subr.mxu0 0.0
    %933 = vmatpush1.msra.mxu0 0.0
    %934 = vmatprep.subr.mxu0 0.0
    %935 = vmatpush1.msra.mxu0 0.0
    %936 = vmatprep.subr.mxu0 0.0
    %937 = vmatpush1.msra.mxu0 0.0
    %938 = vmatprep.subr.mxu0 0.0
    %939 = vmatpush1.msra.mxu0 0.0
    %940 = vmatprep.subr.mxu0 0.0
    %941 = vmatpush1.msra.mxu0 0.0
    %942 = vmatprep.subr.mxu0 0.0
    %943 = vmatpush1.msra.mxu0 0.0
    %944 = vmatprep.subr.mxu0 0.0
    %945 = vmatpush1.msra.mxu0 0.0
    %946 = vmatprep.subr.mxu0 0.0
    %947 = vmatpush1.msra.mxu0 0.0
    %948 = vmatprep.subr.mxu0 0.0
    %949 = vmatpush1.msra.mxu0 0.0
    %950 = vmatprep.subr.mxu0 0.0
    %951 = vmatpush1.msra.mxu0 0.0
    %952 = vmatprep.subr.mxu0 0.0
    %953 = vmatpush1.msra.mxu0 0.0
    %954 = vmatprep.subr.mxu0 0.0
    %955 = vmatpush1.msra.mxu0 0.0
    %956 = vmatprep.subr.mxu0 0.0
    %957 = vmatpush1.msra.mxu0 0.0
    %958 = vmatprep.subr.mxu0 0.0
    %959 = vmatpush1.msra.mxu0 0.0
    %960 = vmatprep.subr.mxu0 0.0
    %961 = vmatpush1.msra.mxu0 0.0
    %962 = vmatprep.subr.mxu0 0.0
    %963 = vmatpush1.msra.mxu0 0.0
    %964 = vmatprep.subr.mxu0 0.0
    %965 = vmatpush1.msra.mxu0 0.0
    %966 = vmatprep.subr.mxu0 0.0
    %967 = vmatpush1.msra.mxu0 0.0
    %968 = vmatprep.subr.mxu0 0.0
    %969 = vmatpush1.msra.mxu0 0.0
    %970 = vmatprep.subr.mxu0 0.0
    %971 = vmatpush1.msra.mxu0 0.0
    %972 = vmatprep.subr.mxu0 0.0
    %973 = vmatpush1.msra.mxu0 0.0
    %974 = vmatprep.subr.mxu0 0.0
    %975 = vmatpush1.msra.mxu0 0.0
    %976 = vmatprep.mubr.f32.mxu0 0.0
    %v977 = vand.u32 %v823, 4294901760
    %978 = vmatmul.mubr.f32.gmra.mrb[0].mxu0 %v977
    %v979 = vpop.f32.mrb[0].mxu0
    %v980 = vadd.f32 %v899, %v979
    %v981 = vpop.f32.mrb[0].mxu0
    %982 = vdwg.mxu0
    %983 = vmatprep.subr.mxu0 0.0
    %v984 = vand.u32 %v819, 4294901760
    %v985 = vsub.f32 %v819, %v984
    %986 = vmatpush1.msra.mxu0 %v985
    %987 = vmatprep.subr.mxu0 0.0
    %v988 = vand.u32 %v820, 4294901760
    %v989 = vsub.f32 %v820, %v988
    %990 = vmatpush1.msra.mxu0 %v989
    %991 = vmatprep.subr.mxu0 0.0
    %992 = vmatpush1.msra.mxu0 0.0
    %993 = vmatprep.subr.mxu0 0.0
    %994 = vmatpush1.msra.mxu0 0.0
    %995 = vmatprep.subr.mxu0 0.0
    %996 = vmatpush1.msra.mxu0 0.0
    %997 = vmatprep.subr.mxu0 0.0
    %998 = vmatpush1.msra.mxu0 0.0
    %999 = vmatprep.subr.mxu0 0.0
    %1000 = vmatpush1.msra.mxu0 0.0
    %1001 = vmatprep.subr.mxu0 0.0
    %1002 = vmatpush1.msra.mxu0 0.0
    %1003 = vmatprep.subr.mxu0 0.0
    %1004 = vmatpush1.msra.mxu0 0.0
    %1005 = vmatprep.subr.mxu0 0.0
    %1006 = vmatpush1.msra.mxu0 0.0
    %1007 = vmatprep.subr.mxu0 0.0
    %1008 = vmatpush1.msra.mxu0 0.0
    %1009 = vmatprep.subr.mxu0 0.0
    %1010 = vmatpush1.msra.mxu0 0.0
    %1011 = vmatprep.subr.mxu0 0.0
    %1012 = vmatpush1.msra.mxu0 0.0
    %1013 = vmatprep.subr.mxu0 0.0
    %1014 = vmatpush1.msra.mxu0 0.0
    %1015 = vmatprep.subr.mxu0 0.0
    %1016 = vmatpush1.msra.mxu0 0.0
    %1017 = vmatprep.subr.mxu0 0.0
    %1018 = vmatpush1.msra.mxu0 0.0
    %1019 = vmatprep.subr.mxu0 0.0
    %1020 = vmatpush1.msra.mxu0 0.0
    %1021 = vmatprep.subr.mxu0 0.0
    %1022 = vmatpush1.msra.mxu0 0.0
    %1023 = vmatprep.subr.mxu0 0.0
    %1024 = vmatpush1.msra.mxu0 0.0
    %1025 = vmatprep.subr.mxu0 0.0
    %1026 = vmatpush1.msra.mxu0 0.0
    %1027 = vmatprep.subr.mxu0 0.0
    %1028 = vmatpush1.msra.mxu0 0.0
    %1029 = vmatprep.subr.mxu0 0.0
    %1030 = vmatpush1.msra.mxu0 0.0
    %1031 = vmatprep.subr.mxu0 0.0
    %1032 = vmatpush1.msra.mxu0 0.0
    %1033 = vmatprep.subr.mxu0 0.0
    %1034 = vmatpush1.msra.mxu0 0.0
    %1035 = vmatprep.subr.mxu0 0.0
    %1036 = vmatpush1.msra.mxu0 0.0
    %1037 = vmatprep.subr.mxu0 0.0
    %1038 = vmatpush1.msra.mxu0 0.0
    %1039 = vmatprep.subr.mxu0 0.0
    %1040 = vmatpush1.msra.mxu0 0.0
    %1041 = vmatprep.subr.mxu0 0.0
    %1042 = vmatpush1.msra.mxu0 0.0
    %1043 = vmatprep.subr.mxu0 0.0
    %1044 = vmatpush1.msra.mxu0 0.0
    %1045 = vmatprep.subr.mxu0 0.0
    %1046 = vmatpush1.msra.mxu0 0.0
    %1047 = vmatprep.subr.mxu0 0.0
    %1048 = vmatpush1.msra.mxu0 0.0
    %1049 = vmatprep.subr.mxu0 0.0
    %1050 = vmatpush1.msra.mxu0 0.0
    %1051 = vmatprep.mubr.f32.mxu0 0.0
    %v1052 = vand.u32 %v823, 4294901760
    %v1053 = vsub.f32 %v823, %v1052
    %1054 = vmatmul.mubr.f32.gmra.mrb[0].mxu0 %v1053
    %v1055 = vpop.f32.mrb[0].mxu0
    %v1056 = vadd.f32 %v980, %v1055
    %v1057 = vpop.f32.mrb[0].mxu0
    %1058 = vdwg.mxu0
    %1059 = vmatprep.subr.mxu0 0.0
    %v1060 = vand.u32 %v819, 4294901760
    %1061 = vmatpush1.msra.mxu0 %v1060
    %1062 = vmatprep.subr.mxu0 0.0
    %v1063 = vand.u32 %v820, 4294901760
    %1064 = vmatpush1.msra.mxu0 %v1063
    %1065 = vmatprep.subr.mxu0 0.0
    %1066 = vmatpush1.msra.mxu0 0.0
    %1067 = vmatprep.subr.mxu0 0.0
    %1068 = vmatpush1.msra.mxu0 0.0
    %1069 = vmatprep.subr.mxu0 0.0
    %1070 = vmatpush1.msra.mxu0 0.0
    %1071 = vmatprep.subr.mxu0 0.0
    %1072 = vmatpush1.msra.mxu0 0.0
    %1073 = vmatprep.subr.mxu0 0.0
    %1074 = vmatpush1.msra.mxu0 0.0
    %1075 = vmatprep.subr.mxu0 0.0
    %1076 = vmatpush1.msra.mxu0 0.0
    %1077 = vmatprep.subr.mxu0 0.0
    %1078 = vmatpush1.msra.mxu0 0.0
    %1079 = vmatprep.subr.mxu0 0.0
    %1080 = vmatpush1.msra.mxu0 0.0
    %1081 = vmatprep.subr.mxu0 0.0
    %1082 = vmatpush1.msra.mxu0 0.0
    %1083 = vmatprep.subr.mxu0 0.0
    %1084 = vmatpush1.msra.mxu0 0.0
    %1085 = vmatprep.subr.mxu0 0.0
    %1086 = vmatpush1.msra.mxu0 0.0
    %1087 = vmatprep.subr.mxu0 0.0
    %1088 = vmatpush1.msra.mxu0 0.0
    %1089 = vmatprep.subr.mxu0 0.0
    %1090 = vmatpush1.msra.mxu0 0.0
    %1091 = vmatprep.subr.mxu0 0.0
    %1092 = vmatpush1.msra.mxu0 0.0
    %1093 = vmatprep.subr.mxu0 0.0
    %1094 = vmatpush1.msra.mxu0 0.0
    %1095 = vmatprep.subr.mxu0 0.0
    %1096 = vmatpush1.msra.mxu0 0.0
    %1097 = vmatprep.subr.mxu0 0.0
    %1098 = vmatpush1.msra.mxu0 0.0
    %1099 = vmatprep.subr.mxu0 0.0
    %1100 = vmatpush1.msra.mxu0 0.0
    %1101 = vmatprep.subr.mxu0 0.0
    %1102 = vmatpush1.msra.mxu0 0.0
    %1103 = vmatprep.subr.mxu0 0.0
    %1104 = vmatpush1.msra.mxu0 0.0
    %1105 = vmatprep.subr.mxu0 0.0
    %1106 = vmatpush1.msra.mxu0 0.0
    %1107 = vmatprep.subr.mxu0 0.0
    %1108 = vmatpush1.msra.mxu0 0.0
    %1109 = vmatprep.subr.mxu0 0.0
    %1110 = vmatpush1.msra.mxu0 0.0
    %1111 = vmatprep.subr.mxu0 0.0
    %1112 = vmatpush1.msra.mxu0 0.0
    %1113 = vmatprep.subr.mxu0 0.0
    %1114 = vmatpush1.msra.mxu0 0.0
    %1115 = vmatprep.subr.mxu0 0.0
    %1116 = vmatpush1.msra.mxu0 0.0
    %1117 = vmatprep.subr.mxu0 0.0
    %1118 = vmatpush1.msra.mxu0 0.0
    %1119 = vmatprep.subr.mxu0 0.0
    %1120 = vmatpush1.msra.mxu0 0.0
    %1121 = vmatprep.subr.mxu0 0.0
    %1122 = vmatpush1.msra.mxu0 0.0
    %1123 = vmatprep.subr.mxu0 0.0
    %1124 = vmatpush1.msra.mxu0 0.0
    %1125 = vmatprep.mubr.f32.mxu0 0.0
    %v1126 = vand.u32 %v823, 4294901760
    %v1127 = vsub.f32 %v823, %v1126
    %v1128 = vand.u32 %v1127, 4294901760
    %1129 = vmatmul.mubr.f32.gmra.mrb[0].mxu0 %v1128
    %v1130 = vpop.f32.mrb[0].mxu0
    %v1131 = vadd.f32 %v1056, %v1130
    %v1132 = vpop.f32.mrb[0].mxu0
    %1133 = vdwg.mxu0
    %1134 = vmatprep.subr.mxu0 0.0
    %v1135 = vand.u32 %v819, 4294901760
    %v1136 = vsub.f32 %v819, %v1135
    %v1137 = vand.u32 %v1136, 4294901760
    %1138 = vmatpush1.msra.mxu0 %v1137
    %1139 = vmatprep.subr.mxu0 0.0
    %v1140 = vand.u32 %v820, 4294901760
    %v1141 = vsub.f32 %v820, %v1140
    %v1142 = vand.u32 %v1141, 4294901760
    %1143 = vmatpush1.msra.mxu0 %v1142
    %1144 = vmatprep.subr.mxu0 0.0
    %1145 = vmatpush1.msra.mxu0 0.0
    %1146 = vmatprep.subr.mxu0 0.0
    %1147 = vmatpush1.msra.mxu0 0.0
    %1148 = vmatprep.subr.mxu0 0.0
    %1149 = vmatpush1.msra.mxu0 0.0
    %1150 = vmatprep.subr.mxu0 0.0
    %1151 = vmatpush1.msra.mxu0 0.0
    %1152 = vmatprep.subr.mxu0 0.0
    %1153 = vmatpush1.msra.mxu0 0.0
    %1154 = vmatprep.subr.mxu0 0.0
    %1155 = vmatpush1.msra.mxu0 0.0
    %1156 = vmatprep.subr.mxu0 0.0
    %1157 = vmatpush1.msra.mxu0 0.0
    %1158 = vmatprep.subr.mxu0 0.0
    %1159 = vmatpush1.msra.mxu0 0.0
    %1160 = vmatprep.subr.mxu0 0.0
    %1161 = vmatpush1.msra.mxu0 0.0
    %1162 = vmatprep.subr.mxu0 0.0
    %1163 = vmatpush1.msra.mxu0 0.0
    %1164 = vmatprep.subr.mxu0 0.0
    %1165 = vmatpush1.msra.mxu0 0.0
    %1166 = vmatprep.subr.mxu0 0.0
    %1167 = vmatpush1.msra.mxu0 0.0
    %1168 = vmatprep.subr.mxu0 0.0
    %1169 = vmatpush1.msra.mxu0 0.0
    %1170 = vmatprep.subr.mxu0 0.0
    %1171 = vmatpush1.msra.mxu0 0.0
    %1172 = vmatprep.subr.mxu0 0.0
    %1173 = vmatpush1.msra.mxu0 0.0
    %1174 = vmatprep.subr.mxu0 0.0
    %1175 = vmatpush1.msra.mxu0 0.0
    %1176 = vmatprep.subr.mxu0 0.0
    %1177 = vmatpush1.msra.mxu0 0.0
    %1178 = vmatprep.subr.mxu0 0.0
    %1179 = vmatpush1.msra.mxu0 0.0
    %1180 = vmatprep.subr.mxu0 0.0
    %1181 = vmatpush1.msra.mxu0 0.0
    %1182 = vmatprep.subr.mxu0 0.0
    %1183 = vmatpush1.msra.mxu0 0.0
    %1184 = vmatprep.subr.mxu0 0.0
    %1185 = vmatpush1.msra.mxu0 0.0
    %1186 = vmatprep.subr.mxu0 0.0
    %1187 = vmatpush1.msra.mxu0 0.0
    %1188 = vmatprep.subr.mxu0 0.0
    %1189 = vmatpush1.msra.mxu0 0.0
    %1190 = vmatprep.subr.mxu0 0.0
    %1191 = vmatpush1.msra.mxu0 0.0
    %1192 = vmatprep.subr.mxu0 0.0
    %1193 = vmatpush1.msra.mxu0 0.0
    %1194 = vmatprep.subr.mxu0 0.0
    %1195 = vmatpush1.msra.mxu0 0.0
    %1196 = vmatprep.subr.mxu0 0.0
    %1197 = vmatpush1.msra.mxu0 0.0
    %1198 = vmatprep.subr.mxu0 0.0
    %1199 = vmatpush1.msra.mxu0 0.0
    %1200 = vmatprep.subr.mxu0 0.0
    %1201 = vmatpush1.msra.mxu0 0.0
    %1202 = vmatprep.subr.mxu0 0.0
    %1203 = vmatpush1.msra.mxu0 0.0
    %1204 = vmatprep.mubr.f32.mxu0 0.0
    %v1205 = vand.u32 %v823, 4294901760
    %1206 = vmatmul.mubr.f32.gmra.mrb[0].mxu0 %v1205
    %v1207 = vpop.f32.mrb[0].mxu0
    %v1208 = vadd.f32 %v1131, %v1207
    %v1209 = vpop.f32.mrb[0].mxu0
    %1210 = vdwg.mxu0
    %1211 = vmatprep.subr.mxu0 0.0
    %v1212 = vand.u32 %v819, 4294901760
    %1213 = vmatpush1.msra.mxu0 %v1212
    %1214 = vmatprep.subr.mxu0 0.0
    %v1215 = vand.u32 %v820, 4294901760
    %1216 = vmatpush1.msra.mxu0 %v1215
    %1217 = vmatprep.subr.mxu0 0.0
    %1218 = vmatpush1.msra.mxu0 0.0
    %1219 = vmatprep.subr.mxu0 0.0
    %1220 = vmatpush1.msra.mxu0 0.0
    %1221 = vmatprep.subr.mxu0 0.0
    %1222 = vmatpush1.msra.mxu0 0.0
    %1223 = vmatprep.subr.mxu0 0.0
    %1224 = vmatpush1.msra.mxu0 0.0
    %1225 = vmatprep.subr.mxu0 0.0
    %1226 = vmatpush1.msra.mxu0 0.0
    %1227 = vmatprep.subr.mxu0 0.0
    %1228 = vmatpush1.msra.mxu0 0.0
    %1229 = vmatprep.subr.mxu0 0.0
    %1230 = vmatpush1.msra.mxu0 0.0
    %1231 = vmatprep.subr.mxu0 0.0
    %1232 = vmatpush1.msra.mxu0 0.0
    %1233 = vmatprep.subr.mxu0 0.0
    %1234 = vmatpush1.msra.mxu0 0.0
    %1235 = vmatprep.subr.mxu0 0.0
    %1236 = vmatpush1.msra.mxu0 0.0
    %1237 = vmatprep.subr.mxu0 0.0
    %1238 = vmatpush1.msra.mxu0 0.0
    %1239 = vmatprep.subr.mxu0 0.0
    %1240 = vmatpush1.msra.mxu0 0.0
    %1241 = vmatprep.subr.mxu0 0.0
    %1242 = vmatpush1.msra.mxu0 0.0
    %1243 = vmatprep.subr.mxu0 0.0
    %1244 = vmatpush1.msra.mxu0 0.0
    %1245 = vmatprep.subr.mxu0 0.0
    %1246 = vmatpush1.msra.mxu0 0.0
    %1247 = vmatprep.subr.mxu0 0.0
    %1248 = vmatpush1.msra.mxu0 0.0
    %1249 = vmatprep.subr.mxu0 0.0
    %1250 = vmatpush1.msra.mxu0 0.0
    %1251 = vmatprep.subr.mxu0 0.0
    %1252 = vmatpush1.msra.mxu0 0.0
    %1253 = vmatprep.subr.mxu0 0.0
    %1254 = vmatpush1.msra.mxu0 0.0
    %1255 = vmatprep.subr.mxu0 0.0
    %1256 = vmatpush1.msra.mxu0 0.0
    %1257 = vmatprep.subr.mxu0 0.0
    %1258 = vmatpush1.msra.mxu0 0.0
    %1259 = vmatprep.subr.mxu0 0.0
    %1260 = vmatpush1.msra.mxu0 0.0
    %1261 = vmatprep.subr.mxu0 0.0
    %1262 = vmatpush1.msra.mxu0 0.0
    %1263 = vmatprep.subr.mxu0 0.0
    %1264 = vmatpush1.msra.mxu0 0.0
    %1265 = vmatprep.subr.mxu0 0.0
    %1266 = vmatpush1.msra.mxu0 0.0
    %1267 = vmatprep.subr.mxu0 0.0
    %1268 = vmatpush1.msra.mxu0 0.0
    %1269 = vmatprep.subr.mxu0 0.0
    %1270 = vmatpush1.msra.mxu0 0.0
    %1271 = vmatprep.subr.mxu0 0.0
    %1272 = vmatpush1.msra.mxu0 0.0
    %1273 = vmatprep.subr.mxu0 0.0
    %1274 = vmatpush1.msra.mxu0 0.0
    %1275 = vmatprep.subr.mxu0 0.0
    %1276 = vmatpush1.msra.mxu0 0.0
    %1277 = vmatprep.mubr.f32.mxu0 0.0
    %v1278 = vand.u32 %v823, 4294901760
    %1279 = vmatmul.mubr.f32.gmra.mrb[0].mxu0 %v1278
    %v1280 = vpop.f32.mrb[0].mxu0
    %v1281 = vadd.f32 %v1208, %v1280
    %v1282 = vpop.f32.mrb[0].mxu0
    %1283 = vdwg.mxu0
    %1284 = vst [vmem:[#allocation2] sm:$0xf] %v1281
    // Predicated region
    $region14: #{tpu_custom_call.1} parent=1 // pred_check
      _
    $region15: #{tpu_custom_call.1} parent=1 // pred_check_branch
      %1286 = sbr.rel (0) target = $region17
    $region16: #{tpu_custom_call.1} parent=1 // pred_region
      %s1288 = ssub.s32 64, 64
      %1289 = vsyncadd [#allocation3], %s1288
      %s1291 = sshll.u32 [#allocation2], 4
      %s1292 = int_to_ptr.vmem [resolvable:$true] %s1291
      %1294 = dma.vmem_to_hbm [thread:$0]  %s1292, 64, %s3, [#allocation3]
    $region17: #{tpu_custom_call.1} parent=1 // pred_fallthru
      _
    // Predicated region
    $region18: #{tpu_custom_call.1} parent=1 // pred_check
      _
    $region19: #{tpu_custom_call.1} parent=1 // pred_check_branch
      %1296 = sbr.rel (0) target = $region21
    $region20: #{tpu_custom_call.1} parent=1 // pred_region
      %1297 = dma.done [#allocation3], 64
    $region21: #{tpu_custom_call.1} parent=1 // pred_fallthru
      _
    %1298 = vsyncpa [#allocation3], 1

</llo_original>
